<compile_context>
chip_gen: v6e
topology: v6e:2x2x1
jax: 0.10.0
libtpu: 0.0.40
codegen_flags: <defaults>
</compile_context>

<pallas_src>
import math

import jax
import jax.numpy as jnp
from jax.experimental import pallas as pl
from jax.experimental.pallas import tpu as pltpu

# small, module-consistent hyperparameters
B = 2            # batch
N = 16           # sequence length
DIM = 32         # model dim
HEADS = 4
DIM_HEAD = 16
DIM_INNER = HEADS * DIM_HEAD      # 64
SCALE = DIM_HEAD ** -0.5


def attention_kernel(x_ref, wqkv_ref, wo_ref, o_ref):
    # x_ref:   (B*N, DIM)           -- batch folded into sublanes
    # wqkv_ref:(DIM, 3*DIM_INNER)   -- columns [Wq | Wk | Wv]
    # wo_ref:  (DIM_INNER, DIM)
    # o_ref:   (B*N, DIM)
    x = x_ref[...]

    # one fused projection matmul for q, k and v of every head
    qkv = jnp.dot(x, wqkv_ref[...], preferred_element_type=jnp.float32)  # (B*N, 3*DIM_INNER)

    # per-(batch, head) attention on static 16x16 tiles; results are packed
    # back into a (B*N, DIM_INNER) slab so the output projection is one matmul
    batch_rows = []
    for b in range(B):                       # static unroll (2)
        r0, r1 = b * N, (b + 1) * N
        head_outs = []
        for h in range(HEADS):               # static unroll (4)
            c = h * DIM_HEAD
            q = qkv[r0:r1, c:c + DIM_HEAD]
            k = qkv[r0:r1, DIM_INNER + c:DIM_INNER + c + DIM_HEAD]
            v = qkv[r0:r1, 2 * DIM_INNER + c:2 * DIM_INNER + c + DIM_HEAD]

            # scores (N, N): contract head dim of q and k on the MXU
            s = jax.lax.dot_general(q, k, (((1,), (1,)), ((), ())),
                                    preferred_element_type=jnp.float32) * SCALE
            s = s - jnp.max(s, axis=-1, keepdims=True)
            p = jnp.exp(s)
            p = p / jnp.sum(p, axis=-1, keepdims=True)        # exact normalization

            head_outs.append(jnp.dot(p, v, preferred_element_type=jnp.float32))
        batch_rows.append(jnp.concatenate(head_outs, axis=-1))  # (N, DIM_INNER)
    o_inner = jnp.concatenate(batch_rows, axis=0)                # (B*N, DIM_INNER)

    # single fused output projection
    o_ref[...] = jnp.dot(o_inner, wo_ref[...],
                         preferred_element_type=jnp.float32).astype(o_ref.dtype)


def attention(x, wq_lin, wkv_lin, wo_lin):
    """x: (B, N, DIM); weights in x @ W form:
       wq_lin (DIM, DIM_INNER), wkv_lin (DIM, 2*DIM_INNER) [k cols | v cols],
       wo_lin (DIM_INNER, DIM)."""
    Bq, Nq, Dq = x.shape
    BN = Bq * Nq

    # wrapper-side fusion: one QKV weight, batch folded into rows of x
    w_qkv = jnp.concatenate([wq_lin, wkv_lin], axis=-1)      # (DIM, 3*DIM_INNER)
    xf = x.reshape(BN, Dq)                                    # (B*N, DIM)

    out = pl.pallas_call(
        attention_kernel,
        out_shape=jax.ShapeDtypeStruct((BN, DIM), jnp.float32),
        grid=(1,),                                            # single step, single TC
        in_specs=[
            pl.BlockSpec((BN, DIM), lambda i: (0, 0)),                 # x (full block)
            pl.BlockSpec((DIM, 3 * DIM_INNER), lambda i: (0, 0)),      # W_qkv
            pl.BlockSpec((DIM_INNER, DIM), lambda i: (0, 0)),          # Wo
        ],
        out_specs=pl.BlockSpec((BN, DIM), lambda i: (0, 0)),
        compiler_params=pltpu.CompilerParams(
            dimension_semantics=("arbitrary",)),
    )(xf, w_qkv, wo_lin)

    return out.reshape(Bq, Nq, DIM)


# ------------------------------ pure-JAX reference ---------------------------
def reference(x, wq_lin, wkv_lin, wo_lin):
    q = x @ wq_lin
    kv = x @ wkv_lin
    k, v = kv[..., :DIM_INNER], kv[..., DIM_INNER:]
    split = lambda t: t.reshape(B, N, HEADS, DIM_HEAD).transpose(0, 2, 1, 3)
    qh, kh, vh = split(q), split(k), split(v)
    s = jnp.einsum('bhnd,bhmd->bhnm', qh, kh) * SCALE
    p = jax.nn.softmax(s, axis=-1)
    o = jnp.einsum('bhnm,bhmd->bhnd', p, vh)
    o = o.transpose(0, 2, 1, 3).reshape(B, N, DIM_INNER)
    return o @ wo_lin


if __name__ == "__main__":
    key = jax.random.PRNGKey(0)
    ks = jax.random.split(key, 4)

    def init(k, shape, fan_in):
        return jax.random.normal(k, shape, jnp.float32) / math.sqrt(fan_in)

    x = jax.random.normal(ks[0], (B, N, DIM), jnp.float32)
    wq_lin = init(ks[1], (DIM, DIM_INNER), DIM)        # to_q  (x @ W form)
    wkv_lin = init(ks[2], (DIM, 2 * DIM_INNER), DIM)   # to_kv (k cols first, then v)
    wo_lin = init(ks[3], (DIM_INNER, DIM), DIM_INNER)  # to_out

    out = jax.block_until_ready(attention(x, wq_lin, wkv_lin, wo_lin))
    ref = jax.block_until_ready(reference(x, wq_lin, wkv_lin, wo_lin))

    assert out.shape == (B, N, DIM)
    assert jnp.allclose(out, ref, atol=2e-3, rtol=2e-3), float(
        jnp.max(jnp.abs(out - ref)))

    print("KERNEL_OK")
</pallas_src>

<mosaic_0001>
module attributes {stable_mosaic.version = 11 : i64} {
  func.func @attention_kernel(%arg0: i32, %arg1: memref<32x32xf32, #tpu.memory_space<vmem>>, %arg2: memref<32x192xf32, #tpu.memory_space<vmem>>, %arg3: memref<64x32xf32, #tpu.memory_space<vmem>>, %arg4: memref<32x32xf32, #tpu.memory_space<vmem>>) attributes {dimension_semantics = [#tpu.dimension_semantics<arbitrary>], iteration_bounds = array<i64: 1>, scalar_prefetch = 0 : i64, scratch_operands = 0 : i64, tpu.core_type = #tpu.core_type<tc>, window_params = [{pipeline_mode = #tpu.pipeline_mode<synchronous>, transform_indices = @transform_0, window_bounds = array<i64: 32, 32>}, {pipeline_mode = #tpu.pipeline_mode<synchronous>, transform_indices = @transform_1, window_bounds = array<i64: 32, 192>}, {pipeline_mode = #tpu.pipeline_mode<synchronous>, transform_indices = @transform_2, window_bounds = array<i64: 64, 32>}, {pipeline_mode = #tpu.pipeline_mode<synchronous>, transform_indices = @transform_3, window_bounds = array<i64: 32, 32>}]} {
    %c0 = arith.constant 0 : index
    %c0_0 = arith.constant 0 : index
    %0 = vector.load %arg1[%c0, %c0_0] : memref<32x32xf32, #tpu.memory_space<vmem>>, vector<32x32xf32>
    %c0_1 = arith.constant 0 : index
    %c0_2 = arith.constant 0 : index
    %1 = vector.load %arg2[%c0_1, %c0_2] : memref<32x192xf32, #tpu.memory_space<vmem>>, vector<32x192xf32>
    %cst = arith.constant dense<0.000000e+00> : vector<32x192xf32>
    %2 = tpu.matmul %0, %1, %cst {dimension_numbers = #tpu.dot_dimension_numbers<[1], [0], [0], [1], [0, 0, 1, 1], [], []>} : vector<32x32xf32>, vector<32x192xf32>, vector<32x192xf32> -> vector<32x192xf32>
    %3 = vector.extract_strided_slice %2 {offsets = [0, 0], sizes = [16, 16], strides = [1, 1]} : vector<32x192xf32> to vector<16x16xf32>
    %4 = vector.extract_strided_slice %2 {offsets = [0, 64], sizes = [16, 16], strides = [1, 1]} : vector<32x192xf32> to vector<16x16xf32>
    %5 = vector.extract_strided_slice %2 {offsets = [0, 128], sizes = [16, 16], strides = [1, 1]} : vector<32x192xf32> to vector<16x16xf32>
    %cst_3 = arith.constant dense<0.000000e+00> : vector<16x16xf32>
    %6 = tpu.matmul %3, %4, %cst_3 {dimension_numbers = #tpu.dot_dimension_numbers<[1], [1], [0], [0], [0, 0, 1, 0], [], []>} : vector<16x16xf32>, vector<16x16xf32>, vector<16x16xf32> -> vector<16x16xf32>
    %cst_4 = arith.constant 2.500000e-01 : f32
    %7 = vector.broadcast %cst_4 : f32 to vector<16x16xf32>
    %8 = arith.mulf %6, %7 : vector<16x16xf32>
    %cst_5 = arith.constant dense<0xFF800000> : vector<16xf32>
    %9 = vector.multi_reduction <maximumf>, %8, %cst_5 [1] : vector<16x16xf32> to vector<16xf32>
    %10 = vector.shape_cast %9 : vector<16xf32> to vector<16x1xf32>
    %11 = vector.broadcast %10 : vector<16x1xf32> to vector<16x16xf32>
    %12 = arith.subf %8, %11 : vector<16x16xf32>
    %13 = math.exp %12 : vector<16x16xf32>
    %cst_6 = arith.constant dense<0.000000e+00> : vector<16xf32>
    %14 = vector.multi_reduction <add>, %13, %cst_6 [1] : vector<16x16xf32> to vector<16xf32>
    %15 = vector.shape_cast %14 : vector<16xf32> to vector<16x1xf32>
    %16 = vector.broadcast %15 : vector<16x1xf32> to vector<16x16xf32>
    %17 = arith.divf %13, %16 : vector<16x16xf32>
    %cst_7 = arith.constant dense<0.000000e+00> : vector<16x16xf32>
    %18 = tpu.matmul %17, %5, %cst_7 {dimension_numbers = #tpu.dot_dimension_numbers<[1], [0], [0], [1], [0, 0, 1, 1], [], []>} : vector<16x16xf32>, vector<16x16xf32>, vector<16x16xf32> -> vector<16x16xf32>
    %19 = vector.extract_strided_slice %2 {offsets = [0, 16], sizes = [16, 16], strides = [1, 1]} : vector<32x192xf32> to vector<16x16xf32>
    %20 = vector.extract_strided_slice %2 {offsets = [0, 80], sizes = [16, 16], strides = [1, 1]} : vector<32x192xf32> to vector<16x16xf32>
    %21 = vector.extract_strided_slice %2 {offsets = [0, 144], sizes = [16, 16], strides = [1, 1]} : vector<32x192xf32> to vector<16x16xf32>
    %cst_8 = arith.constant dense<0.000000e+00> : vector<16x16xf32>
    %22 = tpu.matmul %19, %20, %cst_8 {dimension_numbers = #tpu.dot_dimension_numbers<[1], [1], [0], [0], [0, 0, 1, 0], [], []>} : vector<16x16xf32>, vector<16x16xf32>, vector<16x16xf32> -> vector<16x16xf32>
    %cst_9 = arith.constant 2.500000e-01 : f32
    %23 = vector.broadcast %cst_9 : f32 to vector<16x16xf32>
    %24 = arith.mulf %22, %23 : vector<16x16xf32>
    %cst_10 = arith.constant dense<0xFF800000> : vector<16xf32>
    %25 = vector.multi_reduction <maximumf>, %24, %cst_10 [1] : vector<16x16xf32> to vector<16xf32>
    %26 = vector.shape_cast %25 : vector<16xf32> to vector<16x1xf32>
    %27 = vector.broadcast %26 : vector<16x1xf32> to vector<16x16xf32>
    %28 = arith.subf %24, %27 : vector<16x16xf32>
    %29 = math.exp %28 : vector<16x16xf32>
    %cst_11 = arith.constant dense<0.000000e+00> : vector<16xf32>
    %30 = vector.multi_reduction <add>, %29, %cst_11 [1] : vector<16x16xf32> to vector<16xf32>
    %31 = vector.shape_cast %30 : vector<16xf32> to vector<16x1xf32>
    %32 = vector.broadcast %31 : vector<16x1xf32> to vector<16x16xf32>
    %33 = arith.divf %29, %32 : vector<16x16xf32>
    %cst_12 = arith.constant dense<0.000000e+00> : vector<16x16xf32>
    %34 = tpu.matmul %33, %21, %cst_12 {dimension_numbers = #tpu.dot_dimension_numbers<[1], [0], [0], [1], [0, 0, 1, 1], [], []>} : vector<16x16xf32>, vector<16x16xf32>, vector<16x16xf32> -> vector<16x16xf32>
    %35 = vector.extract_strided_slice %2 {offsets = [0, 32], sizes = [16, 16], strides = [1, 1]} : vector<32x192xf32> to vector<16x16xf32>
    %36 = vector.extract_strided_slice %2 {offsets = [0, 96], sizes = [16, 16], strides = [1, 1]} : vector<32x192xf32> to vector<16x16xf32>
    %37 = vector.extract_strided_slice %2 {offsets = [0, 160], sizes = [16, 16], strides = [1, 1]} : vector<32x192xf32> to vector<16x16xf32>
    %cst_13 = arith.constant dense<0.000000e+00> : vector<16x16xf32>
    %38 = tpu.matmul %35, %36, %cst_13 {dimension_numbers = #tpu.dot_dimension_numbers<[1], [1], [0], [0], [0, 0, 1, 0], [], []>} : vector<16x16xf32>, vector<16x16xf32>, vector<16x16xf32> -> vector<16x16xf32>
    %cst_14 = arith.constant 2.500000e-01 : f32
    %39 = vector.broadcast %cst_14 : f32 to vector<16x16xf32>
    %40 = arith.mulf %38, %39 : vector<16x16xf32>
    %cst_15 = arith.constant dense<0xFF800000> : vector<16xf32>
    %41 = vector.multi_reduction <maximumf>, %40, %cst_15 [1] : vector<16x16xf32> to vector<16xf32>
    %42 = vector.shape_cast %41 : vector<16xf32> to vector<16x1xf32>
    %43 = vector.broadcast %42 : vector<16x1xf32> to vector<16x16xf32>
    %44 = arith.subf %40, %43 : vector<16x16xf32>
    %45 = math.exp %44 : vector<16x16xf32>
    %cst_16 = arith.constant dense<0.000000e+00> : vector<16xf32>
    %46 = vector.multi_reduction <add>, %45, %cst_16 [1] : vector<16x16xf32> to vector<16xf32>
    %47 = vector.shape_cast %46 : vector<16xf32> to vector<16x1xf32>
    %48 = vector.broadcast %47 : vector<16x1xf32> to vector<16x16xf32>
    %49 = arith.divf %45, %48 : vector<16x16xf32>
    %cst_17 = arith.constant dense<0.000000e+00> : vector<16x16xf32>
    %50 = tpu.matmul %49, %37, %cst_17 {dimension_numbers = #tpu.dot_dimension_numbers<[1], [0], [0], [1], [0, 0, 1, 1], [], []>} : vector<16x16xf32>, vector<16x16xf32>, vector<16x16xf32> -> vector<16x16xf32>
    %51 = vector.extract_strided_slice %2 {offsets = [0, 48], sizes = [16, 16], strides = [1, 1]} : vector<32x192xf32> to vector<16x16xf32>
    %52 = vector.extract_strided_slice %2 {offsets = [0, 112], sizes = [16, 16], strides = [1, 1]} : vector<32x192xf32> to vector<16x16xf32>
    %53 = vector.extract_strided_slice %2 {offsets = [0, 176], sizes = [16, 16], strides = [1, 1]} : vector<32x192xf32> to vector<16x16xf32>
    %cst_18 = arith.constant dense<0.000000e+00> : vector<16x16xf32>
    %54 = tpu.matmul %51, %52, %cst_18 {dimension_numbers = #tpu.dot_dimension_numbers<[1], [1], [0], [0], [0, 0, 1, 0], [], []>} : vector<16x16xf32>, vector<16x16xf32>, vector<16x16xf32> -> vector<16x16xf32>
    %cst_19 = arith.constant 2.500000e-01 : f32
    %55 = vector.broadcast %cst_19 : f32 to vector<16x16xf32>
    %56 = arith.mulf %54, %55 : vector<16x16xf32>
    %cst_20 = arith.constant dense<0xFF800000> : vector<16xf32>
    %57 = vector.multi_reduction <maximumf>, %56, %cst_20 [1] : vector<16x16xf32> to vector<16xf32>
    %58 = vector.shape_cast %57 : vector<16xf32> to vector<16x1xf32>
    %59 = vector.broadcast %58 : vector<16x1xf32> to vector<16x16xf32>
    %60 = arith.subf %56, %59 : vector<16x16xf32>
    %61 = math.exp %60 : vector<16x16xf32>
    %cst_21 = arith.constant dense<0.000000e+00> : vector<16xf32>
    %62 = vector.multi_reduction <add>, %61, %cst_21 [1] : vector<16x16xf32> to vector<16xf32>
    %63 = vector.shape_cast %62 : vector<16xf32> to vector<16x1xf32>
    %64 = vector.broadcast %63 : vector<16x1xf32> to vector<16x16xf32>
    %65 = arith.divf %61, %64 : vector<16x16xf32>
    %cst_22 = arith.constant dense<0.000000e+00> : vector<16x16xf32>
    %66 = tpu.matmul %65, %53, %cst_22 {dimension_numbers = #tpu.dot_dimension_numbers<[1], [0], [0], [1], [0, 0, 1, 1], [], []>} : vector<16x16xf32>, vector<16x16xf32>, vector<16x16xf32> -> vector<16x16xf32>
    %67 = tpu.concatenate %18, %34, %50, %66 in 1 : vector<16x16xf32>, vector<16x16xf32>, vector<16x16xf32>, vector<16x16xf32> -> vector<16x64xf32>
    %68 = vector.extract_strided_slice %2 {offsets = [16, 0], sizes = [16, 16], strides = [1, 1]} : vector<32x192xf32> to vector<16x16xf32>
    %69 = vector.extract_strided_slice %2 {offsets = [16, 64], sizes = [16, 16], strides = [1, 1]} : vector<32x192xf32> to vector<16x16xf32>
    %70 = vector.extract_strided_slice %2 {offsets = [16, 128], sizes = [16, 16], strides = [1, 1]} : vector<32x192xf32> to vector<16x16xf32>
    %cst_23 = arith.constant dense<0.000000e+00> : vector<16x16xf32>
    %71 = tpu.matmul %68, %69, %cst_23 {dimension_numbers = #tpu.dot_dimension_numbers<[1], [1], [0], [0], [0, 0, 1, 0], [], []>} : vector<16x16xf32>, vector<16x16xf32>, vector<16x16xf32> -> vector<16x16xf32>
    %cst_24 = arith.constant 2.500000e-01 : f32
    %72 = vector.broadcast %cst_24 : f32 to vector<16x16xf32>
    %73 = arith.mulf %71, %72 : vector<16x16xf32>
    %cst_25 = arith.constant dense<0xFF800000> : vector<16xf32>
    %74 = vector.multi_reduction <maximumf>, %73, %cst_25 [1] : vector<16x16xf32> to vector<16xf32>
    %75 = vector.shape_cast %74 : vector<16xf32> to vector<16x1xf32>
    %76 = vector.broadcast %75 : vector<16x1xf32> to vector<16x16xf32>
    %77 = arith.subf %73, %76 : vector<16x16xf32>
    %78 = math.exp %77 : vector<16x16xf32>
    %cst_26 = arith.constant dense<0.000000e+00> : vector<16xf32>
    %79 = vector.multi_reduction <add>, %78, %cst_26 [1] : vector<16x16xf32> to vector<16xf32>
    %80 = vector.shape_cast %79 : vector<16xf32> to vector<16x1xf32>
    %81 = vector.broadcast %80 : vector<16x1xf32> to vector<16x16xf32>
    %82 = arith.divf %78, %81 : vector<16x16xf32>
    %cst_27 = arith.constant dense<0.000000e+00> : vector<16x16xf32>
    %83 = tpu.matmul %82, %70, %cst_27 {dimension_numbers = #tpu.dot_dimension_numbers<[1], [0], [0], [1], [0, 0, 1, 1], [], []>} : vector<16x16xf32>, vector<16x16xf32>, vector<16x16xf32> -> vector<16x16xf32>
    %84 = vector.extract_strided_slice %2 {offsets = [16, 16], sizes = [16, 16], strides = [1, 1]} : vector<32x192xf32> to vector<16x16xf32>
    %85 = vector.extract_strided_slice %2 {offsets = [16, 80], sizes = [16, 16], strides = [1, 1]} : vector<32x192xf32> to vector<16x16xf32>
    %86 = vector.extract_strided_slice %2 {offsets = [16, 144], sizes = [16, 16], strides = [1, 1]} : vector<32x192xf32> to vector<16x16xf32>
    %cst_28 = arith.constant dense<0.000000e+00> : vector<16x16xf32>
    %87 = tpu.matmul %84, %85, %cst_28 {dimension_numbers = #tpu.dot_dimension_numbers<[1], [1], [0], [0], [0, 0, 1, 0], [], []>} : vector<16x16xf32>, vector<16x16xf32>, vector<16x16xf32> -> vector<16x16xf32>
    %cst_29 = arith.constant 2.500000e-01 : f32
    %88 = vector.broadcast %cst_29 : f32 to vector<16x16xf32>
    %89 = arith.mulf %87, %88 : vector<16x16xf32>
    %cst_30 = arith.constant dense<0xFF800000> : vector<16xf32>
    %90 = vector.multi_reduction <maximumf>, %89, %cst_30 [1] : vector<16x16xf32> to vector<16xf32>
    %91 = vector.shape_cast %90 : vector<16xf32> to vector<16x1xf32>
    %92 = vector.broadcast %91 : vector<16x1xf32> to vector<16x16xf32>
    %93 = arith.subf %89, %92 : vector<16x16xf32>
    %94 = math.exp %93 : vector<16x16xf32>
    %cst_31 = arith.constant dense<0.000000e+00> : vector<16xf32>
    %95 = vector.multi_reduction <add>, %94, %cst_31 [1] : vector<16x16xf32> to vector<16xf32>
    %96 = vector.shape_cast %95 : vector<16xf32> to vector<16x1xf32>
    %97 = vector.broadcast %96 : vector<16x1xf32> to vector<16x16xf32>
    %98 = arith.divf %94, %97 : vector<16x16xf32>
    %cst_32 = arith.constant dense<0.000000e+00> : vector<16x16xf32>
    %99 = tpu.matmul %98, %86, %cst_32 {dimension_numbers = #tpu.dot_dimension_numbers<[1], [0], [0], [1], [0, 0, 1, 1], [], []>} : vector<16x16xf32>, vector<16x16xf32>, vector<16x16xf32> -> vector<16x16xf32>
    %100 = vector.extract_strided_slice %2 {offsets = [16, 32], sizes = [16, 16], strides = [1, 1]} : vector<32x192xf32> to vector<16x16xf32>
    %101 = vector.extract_strided_slice %2 {offsets = [16, 96], sizes = [16, 16], strides = [1, 1]} : vector<32x192xf32> to vector<16x16xf32>
    %102 = vector.extract_strided_slice %2 {offsets = [16, 160], sizes = [16, 16], strides = [1, 1]} : vector<32x192xf32> to vector<16x16xf32>
    %cst_33 = arith.constant dense<0.000000e+00> : vector<16x16xf32>
    %103 = tpu.matmul %100, %101, %cst_33 {dimension_numbers = #tpu.dot_dimension_numbers<[1], [1], [0], [0], [0, 0, 1, 0], [], []>} : vector<16x16xf32>, vector<16x16xf32>, vector<16x16xf32> -> vector<16x16xf32>
    %cst_34 = arith.constant 2.500000e-01 : f32
    %104 = vector.broadcast %cst_34 : f32 to vector<16x16xf32>
    %105 = arith.mulf %103, %104 : vector<16x16xf32>
    %cst_35 = arith.constant dense<0xFF800000> : vector<16xf32>
    %106 = vector.multi_reduction <maximumf>, %105, %cst_35 [1] : vector<16x16xf32> to vector<16xf32>
    %107 = vector.shape_cast %106 : vector<16xf32> to vector<16x1xf32>
    %108 = vector.broadcast %107 : vector<16x1xf32> to vector<16x16xf32>
    %109 = arith.subf %105, %108 : vector<16x16xf32>
    %110 = math.exp %109 : vector<16x16xf32>
    %cst_36 = arith.constant dense<0.000000e+00> : vector<16xf32>
    %111 = vector.multi_reduction <add>, %110, %cst_36 [1] : vector<16x16xf32> to vector<16xf32>
    %112 = vector.shape_cast %111 : vector<16xf32> to vector<16x1xf32>
    %113 = vector.broadcast %112 : vector<16x1xf32> to vector<16x16xf32>
    %114 = arith.divf %110, %113 : vector<16x16xf32>
    %cst_37 = arith.constant dense<0.000000e+00> : vector<16x16xf32>
    %115 = tpu.matmul %114, %102, %cst_37 {dimension_numbers = #tpu.dot_dimension_numbers<[1], [0], [0], [1], [0, 0, 1, 1], [], []>} : vector<16x16xf32>, vector<16x16xf32>, vector<16x16xf32> -> vector<16x16xf32>
    %116 = vector.extract_strided_slice %2 {offsets = [16, 48], sizes = [16, 16], strides = [1, 1]} : vector<32x192xf32> to vector<16x16xf32>
    %117 = vector.extract_strided_slice %2 {offsets = [16, 112], sizes = [16, 16], strides = [1, 1]} : vector<32x192xf32> to vector<16x16xf32>
    %118 = vector.extract_strided_slice %2 {offsets = [16, 176], sizes = [16, 16], strides = [1, 1]} : vector<32x192xf32> to vector<16x16xf32>
    %cst_38 = arith.constant dense<0.000000e+00> : vector<16x16xf32>
    %119 = tpu.matmul %116, %117, %cst_38 {dimension_numbers = #tpu.dot_dimension_numbers<[1], [1], [0], [0], [0, 0, 1, 0], [], []>} : vector<16x16xf32>, vector<16x16xf32>, vector<16x16xf32> -> vector<16x16xf32>
    %cst_39 = arith.constant 2.500000e-01 : f32
    %120 = vector.broadcast %cst_39 : f32 to vector<16x16xf32>
    %121 = arith.mulf %119, %120 : vector<16x16xf32>
    %cst_40 = arith.constant dense<0xFF800000> : vector<16xf32>
    %122 = vector.multi_reduction <maximumf>, %121, %cst_40 [1] : vector<16x16xf32> to vector<16xf32>
    %123 = vector.shape_cast %122 : vector<16xf32> to vector<16x1xf32>
    %124 = vector.broadcast %123 : vector<16x1xf32> to vector<16x16xf32>
    %125 = arith.subf %121, %124 : vector<16x16xf32>
    %126 = math.exp %125 : vector<16x16xf32>
    %cst_41 = arith.constant dense<0.000000e+00> : vector<16xf32>
    %127 = vector.multi_reduction <add>, %126, %cst_41 [1] : vector<16x16xf32> to vector<16xf32>
    %128 = vector.shape_cast %127 : vector<16xf32> to vector<16x1xf32>
    %129 = vector.broadcast %128 : vector<16x1xf32> to vector<16x16xf32>
    %130 = arith.divf %126, %129 : vector<16x16xf32>
    %cst_42 = arith.constant dense<0.000000e+00> : vector<16x16xf32>
    %131 = tpu.matmul %130, %118, %cst_42 {dimension_numbers = #tpu.dot_dimension_numbers<[1], [0], [0], [1], [0, 0, 1, 1], [], []>} : vector<16x16xf32>, vector<16x16xf32>, vector<16x16xf32> -> vector<16x16xf32>
    %132 = tpu.concatenate %83, %99, %115, %131 in 1 : vector<16x16xf32>, vector<16x16xf32>, vector<16x16xf32>, vector<16x16xf32> -> vector<16x64xf32>
    %133 = tpu.concatenate %67, %132 in 0 : vector<16x64xf32>, vector<16x64xf32> -> vector<32x64xf32>
    %c0_43 = arith.constant 0 : index
    %c0_44 = arith.constant 0 : index
    %134 = vector.load %arg3[%c0_43, %c0_44] : memref<64x32xf32, #tpu.memory_space<vmem>>, vector<64x32xf32>
    %cst_45 = arith.constant dense<0.000000e+00> : vector<32x32xf32>
    %135 = tpu.matmul %133, %134, %cst_45 {dimension_numbers = #tpu.dot_dimension_numbers<[1], [0], [0], [1], [0, 0, 1, 1], [], []>} : vector<32x64xf32>, vector<64x32xf32>, vector<32x32xf32> -> vector<32x32xf32>
    %c0_46 = arith.constant 0 : index
    %c0_47 = arith.constant 0 : index
    %136 = vector.load %arg4[%c0_46, %c0_47] : memref<32x32xf32, #tpu.memory_space<vmem>>, vector<32x32xf32>
    tpu.vector_store %arg4[%c0_46, %c0_47], %135 {strides = array<i32>} : memref<32x32xf32, #tpu.memory_space<vmem>>, vector<32x32xf32>,
    return
  }
  func.func @transform_0(%arg0: i32) -> (i32, i32) {
    %c0_i32 = arith.constant 0 : i32
    %c0_i32_0 = arith.constant 0 : i32
    %c0_i32_1 = arith.constant 0 : i32
    return %c0_i32, %c0_i32_0 : i32, i32
  }
  func.func @transform_1(%arg0: i32) -> (i32, i32) {
    %c0_i32 = arith.constant 0 : i32
    %c0_i32_0 = arith.constant 0 : i32
    %c0_i32_1 = arith.constant 0 : i32
    return %c0_i32, %c0_i32_0 : i32, i32
  }
  func.func @transform_2(%arg0: i32) -> (i32, i32) {
    %c0_i32 = arith.constant 0 : i32
    %c0_i32_0 = arith.constant 0 : i32
    %c0_i32_1 = arith.constant 0 : i32
    return %c0_i32, %c0_i32_0 : i32, i32
  }
  func.func @transform_3(%arg0: i32) -> (i32, i32) {
    %c0_i32 = arith.constant 0 : i32
    %c0_i32_0 = arith.constant 0 : i32
    %c0_i32_1 = arith.constant 0 : i32
    return %c0_i32, %c0_i32_0 : i32, i32
  }
}

</mosaic_0001>

<llo_original>
// kernel: tpu_custom_call.1
$region0: #{tpu_custom_call.1}
  #allocation0 [shape = 'u32[]', space=smem, size = 0x4, offset = 0x4, fixed_abs, tag = 'smem constant byte address 0x4 - core index']
  #allocation1 [shape = 'u32[144,128]{1,0:T(1,128)}', space=vmem, size = 0x12000, scoped, tag = 'internal scratch']
  %s0 = inlined_call_operand.vmem [shape: f32[32,32], index: 0, kind: input, shape index: {}]
  %s1 = inlined_call_operand.vmem [shape: f32[32,192], index: 1, kind: input, shape index: {}]
  %s2 = inlined_call_operand.vmem [shape: f32[64,32], index: 2, kind: input, shape index: {}]
  %s3 = inlined_call_operand.hbm [shape: f32[32,32], index: 3, kind: output, shape index: {}]
  %s4 = sld [smem:[#allocation0]]
  $region22: #{tpu_custom_call.1} parent=0
    _
  %s6 = ssub.s32 1, %s4
  %s7 = scalar_select 0, %s6, %s4
  $region1: #{tpu_custom_call.1} parent=0
    #allocation2 [shape = 'u8[16384]{0}', space=vmem, size = 0x4000, scoped, tag = 'output window, operand 0, single buffered']
    #allocation3 [shape = 's32[1]{0}', space=sflag, size = 0x4, scoped, tag = 'scoped memory for tpu_custom_call.1']
    %8 = vsyncpa [#allocation3], 0
    // Predicated region
    $region2: #{tpu_custom_call.1} parent=1 // pred_check
      _
    $region3: #{tpu_custom_call.1} parent=1 // pred_check_branch
      %10 = sbr.rel (0) target = $region5
    $region4: #{tpu_custom_call.1} parent=1 // pred_region
      _
    $region5: #{tpu_custom_call.1} parent=1 // pred_fallthru
      _
    // Predicated region
    $region6: #{tpu_custom_call.1} parent=1 // pred_check
      _
    $region7: #{tpu_custom_call.1} parent=1 // pred_check_branch
      %12 = sbr.rel (0) target = $region9
    $region8: #{tpu_custom_call.1} parent=1 // pred_region
      _
    $region9: #{tpu_custom_call.1} parent=1 // pred_fallthru
      _
    // Predicated region
    $region10: #{tpu_custom_call.1} parent=1 // pred_check
      _
    $region11: #{tpu_custom_call.1} parent=1 // pred_check_branch
      %14 = sbr.rel (0) target = $region13
    $region12: #{tpu_custom_call.1} parent=1 // pred_region
      _
    $region13: #{tpu_custom_call.1} parent=1 // pred_fallthru
      _
    %v15 = vld [vmem:[%s0] sm:$0xff]
    %v16 = vld [vmem:[%s0 + $0x8] sm:$0xff]
    %v17 = vld [vmem:[%s0 + $0x10] sm:$0xff]
    %v18 = vld [vmem:[%s0 + $0x18] sm:$0xff]
    %v19 = vld [vmem:[%s1] sm:$0xff]
    %v20 = vld [vmem:[%s1 + $0x8] sm:$0xff]
    %v21 = vld [vmem:[%s1 + $0x10] sm:$0xff]
    %v22 = vld [vmem:[%s1 + $0x18] sm:$0xff]
    %v23 = vld [vmem:[%s1 + $0x20] sm:$0xff]
    %v24 = vld [vmem:[%s1 + $0x28] sm:$0xff]
    %v25 = vld [vmem:[%s1 + $0x30] sm:$0xff]
    %v26 = vld [vmem:[%s1 + $0x38] sm:$0xff]
    %vm27 = vcmask 261120
    %v29 = vsel %vm27, %v15, 0
    %v32 = vsel %vm27, %v16, 0
    %v35 = vsel %vm27, %v17, 0
    %v38 = vsel %vm27, %v18, 0
    %40 = vmatprep.subr.mxu0 0.0
    %41 = vmatpush1.msra.mxu0 0.0
    %42 = vmatprep.subr.mxu0 0.0
    %43 = vmatpush1.msra.mxu0 0.0
    %44 = vmatprep.subr.mxu0 0.0
    %45 = vmatpush1.msra.mxu0 0.0
    %46 = vmatprep.subr.mxu0 0.0
    %47 = vmatpush1.msra.mxu0 0.0
    %48 = vmatprep.subr.mxu0 0.0
    %49 = vmatpush1.msra.mxu0 0.0
    %50 = vmatprep.subr.mxu0 0.0
    %51 = vmatpush1.msra.mxu0 0.0
    %52 = vmatprep.subr.mxu0 0.0
    %53 = vmatpush1.msra.mxu0 0.0
    %54 = vmatprep.subr.mxu0 0.0
    %55 = vmatpush1.msra.mxu0 0.0
    %56 = vmatprep.subr.mxu0 0.0
    %57 = vmatpush1.msra.mxu0 0.0
    %58 = vmatprep.subr.mxu0 0.0
    %59 = vmatpush1.msra.mxu0 0.0
    %60 = vmatprep.subr.mxu0 0.0
    %61 = vmatpush1.msra.mxu0 0.0
    %62 = vmatprep.subr.mxu0 0.0
    %63 = vmatpush1.msra.mxu0 0.0
    %64 = vmatprep.subr.mxu0 %v26
    %65 = vmatpush1.msra.mxu0 %v25
    %66 = vmatprep.subr.mxu0 %v24
    %67 = vmatpush1.msra.mxu0 %v23
    %68 = vmatprep.subr.mxu0 %v22
    %69 = vmatpush1.msra.mxu0 %v21
    %70 = vmatprep.subr.mxu0 %v20
    %71 = vmatpush1.msra.mxu0 %v19
    %72 = vmatprep.subr.mxu0 0.0
    %73 = vmatpush2.msra.mxu0 0.0
    %74 = vmatprep.subr.mxu0 0.0
    %75 = vmatpush2.msra.mxu0 0.0
    %76 = vmatprep.subr.mxu0 0.0
    %77 = vmatpush2.msra.mxu0 0.0
    %78 = vmatprep.subr.mxu0 0.0
    %79 = vmatpush2.msra.mxu0 0.0
    %80 = vmatprep.subr.mxu0 0.0
    %81 = vmatpush2.msra.mxu0 0.0
    %82 = vmatprep.subr.mxu0 0.0
    %83 = vmatpush2.msra.mxu0 0.0
    %84 = vmatprep.subr.mxu0 0.0
    %85 = vmatpush2.msra.mxu0 0.0
    %86 = vmatprep.subr.mxu0 0.0
    %87 = vmatpush2.msra.mxu0 0.0
    %88 = vmatprep.subr.mxu0 0.0
    %89 = vmatpush2.msra.mxu0 0.0
    %90 = vmatprep.subr.mxu0 0.0
    %91 = vmatpush2.msra.mxu0 0.0
    %92 = vmatprep.subr.mxu0 0.0
    %93 = vmatpush2.msra.mxu0 0.0
    %94 = vmatprep.subr.mxu0 0.0
    %95 = vmatpush2.msra.mxu0 0.0
    %96 = vmatprep.subr.mxu0 0.0
    %97 = vmatpush2.msra.mxu0 0.0
    %98 = vmatprep.subr.mxu0 0.0
    %99 = vmatpush2.msra.mxu0 0.0
    %100 = vmatprep.subr.mxu0 0.0
    %101 = vmatpush2.msra.mxu0 0.0
    %102 = vmatprep.subr.mxu0 0.0
    %103 = vmatpush2.msra.mxu0 0.0
    %104 = vmatprep.mubr.f32.mxu0 0.0
    %105 = vmatmul.mubr.f32.gmra.mxu0 %v29
    %v106 = vpop.f32.mrf.mxu0
    %v107 = vadd.f32 0.0, %v106
    %v108 = vpop.f32.mrf.mxu0
    %v109 = vadd.f32 0.0, %v108
    %110 = vmatprep.mubr.f32.mxu0 0.0
    %111 = vmatmul.mubr.f32.gmra.mxu0 %v32
    %v112 = vpop.f32.mrf.mxu0
    %v113 = vadd.f32 0.0, %v112
    %v114 = vpop.f32.mrf.mxu0
    %v115 = vadd.f32 0.0, %v114
    %116 = vmatprep.mubr.f32.mxu0 0.0
    %117 = vmatmul.mubr.f32.gmra.mxu0 %v35
    %v118 = vpop.f32.mrf.mxu0
    %v119 = vadd.f32 0.0, %v118
    %v120 = vpop.f32.mrf.mxu0
    %v121 = vadd.f32 0.0, %v120
    %122 = vmatprep.mubr.f32.mxu0 0.0
    %123 = vmatmul.mubr.f32.gmra.mxu0 %v38
    %v124 = vpop.f32.mrf.mxu0
    %v125 = vadd.f32 0.0, %v124
    %v126 = vpop.f32.mrf.mxu0
    %v127 = vadd.f32 0.0, %v126
    %128 = vdwg.mxu0
    %131 = vrot.lane.b32.xlu0 %v107, 64
    %v132 = vpop.permute.xlu0 %131
    %133 = vrot.lane.b32.xlu0 %v113, 64
    %v134 = vpop.permute.xlu0 %133
    %vm135 = vcmask 130048
    %v136 = vsel %vm135, %v107, 0
    %v138 = vsel %vm135, %v113, 0
    %v140 = vsel %vm135, %v132, 0
    %v142 = vsel %vm135, %v134, 0
    %144 = vmatprep.subr.mxu0 0.0
    %145 = vmatpush1.xpose.msra.mxu0 0.0
    %146 = vmatprep.subr.mxu0 0.0
    %147 = vmatpush1.xpose.msra.mxu0 0.0
    %148 = vmatprep.subr.mxu0 0.0
    %149 = vmatpush1.xpose.msra.mxu0 0.0
    %150 = vmatprep.subr.mxu0 0.0
    %151 = vmatpush1.xpose.msra.mxu0 0.0
    %152 = vmatprep.subr.mxu0 0.0
    %153 = vmatpush1.xpose.msra.mxu0 0.0
    %154 = vmatprep.subr.mxu0 0.0
    %155 = vmatpush1.xpose.msra.mxu0 0.0
    %156 = vmatprep.subr.mxu0 0.0
    %157 = vmatpush1.xpose.msra.mxu0 0.0
    %158 = vmatprep.subr.mxu0 0.0
    %159 = vmatpush1.xpose.msra.mxu0 0.0
    %160 = vmatprep.subr.mxu0 0.0
    %161 = vmatpush1.xpose.msra.mxu0 0.0
    %162 = vmatprep.subr.mxu0 0.0
    %163 = vmatpush1.xpose.msra.mxu0 0.0
    %164 = vmatprep.subr.mxu0 0.0
    %165 = vmatpush1.xpose.msra.mxu0 0.0
    %166 = vmatprep.subr.mxu0 0.0
    %167 = vmatpush1.xpose.msra.mxu0 0.0
    %168 = vmatprep.subr.mxu0 0.0
    %169 = vmatpush1.xpose.msra.mxu0 0.0
    %170 = vmatprep.subr.mxu0 0.0
    %171 = vmatpush1.xpose.msra.mxu0 0.0
    %172 = vmatprep.subr.mxu0 0.0
    %173 = vmatpush1.xpose.msra.mxu0 %v142
    %174 = vmatprep.subr.mxu0 0.0
    %175 = vmatpush1.xpose.msra.mxu0 %v140
    %176 = vmatprep.subr.mxu0 0.0
    %177 = vmatpush2.xpose.msra.mxu0 0.0
    %178 = vmatprep.subr.mxu0 0.0
    %179 = vmatpush2.xpose.msra.mxu0 0.0
    %180 = vmatprep.subr.mxu0 0.0
    %181 = vmatpush2.xpose.msra.mxu0 0.0
    %182 = vmatprep.subr.mxu0 0.0
    %183 = vmatpush2.xpose.msra.mxu0 0.0
    %184 = vmatprep.subr.mxu0 0.0
    %185 = vmatpush2.xpose.msra.mxu0 0.0
    %186 = vmatprep.subr.mxu0 0.0
    %187 = vmatpush2.xpose.msra.mxu0 0.0
    %188 = vmatprep.subr.mxu0 0.0
    %189 = vmatpush2.xpose.msra.mxu0 0.0
    %190 = vmatprep.subr.mxu0 0.0
    %191 = vmatpush2.xpose.msra.mxu0 0.0
    %192 = vmatprep.subr.mxu0 0.0
    %193 = vmatpush2.xpose.msra.mxu0 0.0
    %194 = vmatprep.subr.mxu0 0.0
    %195 = vmatpush2.xpose.msra.mxu0 0.0
    %196 = vmatprep.subr.mxu0 0.0
    %197 = vmatpush2.xpose.msra.mxu0 0.0
    %198 = vmatprep.subr.mxu0 0.0
    %199 = vmatpush2.xpose.msra.mxu0 0.0
    %200 = vmatprep.subr.mxu0 0.0
    %201 = vmatpush2.xpose.msra.mxu0 0.0
    %202 = vmatprep.subr.mxu0 0.0
    %203 = vmatpush2.xpose.msra.mxu0 0.0
    %204 = vmatprep.subr.mxu0 0.0
    %205 = vmatpush2.xpose.msra.mxu0 0.0
    %206 = vmatprep.subr.mxu0 0.0
    %207 = vmatpush2.xpose.msra.mxu0 0.0
    %208 = vmatprep.mubr.f32.mxu0 0.0
    %209 = vmatmul.mubr.f32.gmra.mxu0 %v136
    %v210 = vpop.f32.mrf.mxu0
    %v211 = vadd.f32 0.0, %v210
    %v212 = vpop.f32.mrf.mxu0
    %213 = vmatprep.mubr.f32.mxu0 0.0
    %214 = vmatmul.mubr.f32.gmra.mxu0 %v138
    %v215 = vpop.f32.mrf.mxu0
    %v216 = vadd.f32 0.0, %v215
    %v217 = vpop.f32.mrf.mxu0
    %218 = vdwg.mxu0
    %v219 = vmul.f32 %v211, 0.25
    %v220 = vmul.f32 %v216, 0.25
    %v221 = vsel %vm135, %v219, -inf
    %222 = vmax.xlane.f32.xlu0 %v221
    %v223 = vpop.xlane.xlu0 %222
    %v224 = vsel %vm135, %v220, -inf
    %225 = vmax.xlane.f32.xlu0 %v224
    %v226 = vpop.xlane.xlu0 %225
    %v227 = vsub.f32 %v219, %v223
    %v228 = vsub.f32 %v220, %v226
    %v229 = vmul.f32 %v227, 1.442695
    %v230 = vpow.pop %v229
    %v231 = vmul.f32 %v228, 1.442695
    %v232 = vpow.pop %v231
    %v233 = vsel %vm135, %v230, 0.0
    %234 = vadd.xlane.f32.xlu0 %v233
    %v235 = vpop.xlane.xlu0 %234
    %v236 = vsel %vm135, %v232, 0.0
    %237 = vadd.xlane.f32.xlu0 %v236
    %v238 = vpop.xlane.xlu0 %237
    %v239 = vrcp.pop %v235
    %v240 = vmul.f32 %v230, %v239
    %v241 = vrcp.pop %v238
    %v242 = vmul.f32 %v232, %v241
    %v244 = vsel %vm135, %v240, 0
    %v247 = vsel %vm135, %v242, 0
    %249 = vmatprep.subr.mxu0 0.0
    %250 = vmatpush1.msra.mxu0 0.0
    %251 = vmatprep.subr.mxu0 0.0
    %252 = vmatpush1.msra.mxu0 0.0
    %253 = vmatprep.subr.mxu0 0.0
    %254 = vmatpush1.msra.mxu0 0.0
    %255 = vmatprep.subr.mxu0 0.0
    %256 = vmatpush1.msra.mxu0 0.0
    %257 = vmatprep.subr.mxu0 0.0
    %258 = vmatpush1.msra.mxu0 0.0
    %259 = vmatprep.subr.mxu0 0.0
    %260 = vmatpush1.msra.mxu0 0.0
    %261 = vmatprep.subr.mxu0 0.0
    %262 = vmatpush1.msra.mxu0 0.0
    %263 = vmatprep.subr.mxu0 0.0
    %264 = vmatpush1.msra.mxu0 0.0
    %265 = vmatprep.subr.mxu0 0.0
    %266 = vmatpush1.msra.mxu0 0.0
    %267 = vmatprep.subr.mxu0 0.0
    %268 = vmatpush1.msra.mxu0 0.0
    %269 = vmatprep.subr.mxu0 0.0
    %270 = vmatpush1.msra.mxu0 0.0
    %271 = vmatprep.subr.mxu0 0.0
    %272 = vmatpush1.msra.mxu0 0.0
    %273 = vmatprep.subr.mxu0 0.0
    %274 = vmatpush1.msra.mxu0 0.0
    %275 = vmatprep.subr.mxu0 0.0
    %276 = vmatpush1.msra.mxu0 0.0
    %277 = vmatprep.subr.mxu0 0.0
    %278 = vmatpush1.msra.mxu0 %v115
    %279 = vmatprep.subr.mxu0 0.0
    %280 = vmatpush1.msra.mxu0 %v109
    %281 = vmatprep.subr.mxu0 0.0
    %282 = vmatpush2.msra.mxu0 0.0
    %283 = vmatprep.subr.mxu0 0.0
    %284 = vmatpush2.msra.mxu0 0.0
    %285 = vmatprep.subr.mxu0 0.0
    %286 = vmatpush2.msra.mxu0 0.0
    %287 = vmatprep.subr.mxu0 0.0
    %288 = vmatpush2.msra.mxu0 0.0
    %289 = vmatprep.subr.mxu0 0.0
    %290 = vmatpush2.msra.mxu0 0.0
    %291 = vmatprep.subr.mxu0 0.0
    %292 = vmatpush2.msra.mxu0 0.0
    %293 = vmatprep.subr.mxu0 0.0
    %294 = vmatpush2.msra.mxu0 0.0
    %295 = vmatprep.subr.mxu0 0.0
    %296 = vmatpush2.msra.mxu0 0.0
    %297 = vmatprep.subr.mxu0 0.0
    %298 = vmatpush2.msra.mxu0 0.0
    %299 = vmatprep.subr.mxu0 0.0
    %300 = vmatpush2.msra.mxu0 0.0
    %301 = vmatprep.subr.mxu0 0.0
    %302 = vmatpush2.msra.mxu0 0.0
    %303 = vmatprep.subr.mxu0 0.0
    %304 = vmatpush2.msra.mxu0 0.0
    %305 = vmatprep.subr.mxu0 0.0
    %306 = vmatpush2.msra.mxu0 0.0
    %307 = vmatprep.subr.mxu0 0.0
    %308 = vmatpush2.msra.mxu0 0.0
    %309 = vmatprep.subr.mxu0 0.0
    %310 = vmatpush2.msra.mxu0 0.0
    %311 = vmatprep.subr.mxu0 0.0
    %312 = vmatpush2.msra.mxu0 0.0
    %313 = vmatprep.mubr.f32.mxu0 0.0
    %314 = vmatmul.mubr.f32.gmra.mxu0 %v244
    %v315 = vpop.f32.mrf.mxu0
    %v316 = vadd.f32 0.0, %v315
    %v317 = vpop.f32.mrf.mxu0
    %318 = vmatprep.mubr.f32.mxu0 0.0
    %319 = vmatmul.mubr.f32.gmra.mxu0 %v247
    %v320 = vpop.f32.mrf.mxu0
    %v321 = vadd.f32 0.0, %v320
    %v322 = vpop.f32.mrf.mxu0
    %323 = vdwg.mxu0
    %324 = vrot.lane.b32.xlu0 %v107, 112
    %v325 = vpop.permute.xlu0 %324
    %326 = vrot.lane.b32.xlu0 %v113, 112
    %v327 = vpop.permute.xlu0 %326
    %328 = vrot.lane.b32.xlu0 %v107, 48
    %v329 = vpop.permute.xlu0 %328
    %330 = vrot.lane.b32.xlu0 %v113, 48
    %v331 = vpop.permute.xlu0 %330
    %v332 = vsel %vm135, %v325, 0
    %v334 = vsel %vm135, %v327, 0
    %v336 = vsel %vm135, %v329, 0
    %v338 = vsel %vm135, %v331, 0
    %340 = vmatprep.subr.mxu0 0.0
    %341 = vmatpush1.xpose.msra.mxu0 0.0
    %342 = vmatprep.subr.mxu0 0.0
    %343 = vmatpush1.xpose.msra.mxu0 0.0
    %344 = vmatprep.subr.mxu0 0.0
    %345 = vmatpush1.xpose.msra.mxu0 0.0
    %346 = vmatprep.subr.mxu0 0.0
    %347 = vmatpush1.xpose.msra.mxu0 0.0
    %348 = vmatprep.subr.mxu0 0.0
    %349 = vmatpush1.xpose.msra.mxu0 0.0
    %350 = vmatprep.subr.mxu0 0.0
    %351 = vmatpush1.xpose.msra.mxu0 0.0
    %352 = vmatprep.subr.mxu0 0.0
    %353 = vmatpush1.xpose.msra.mxu0 0.0
    %354 = vmatprep.subr.mxu0 0.0
    %355 = vmatpush1.xpose.msra.mxu0 0.0
    %356 = vmatprep.subr.mxu0 0.0
    %357 = vmatpush1.xpose.msra.mxu0 0.0
    %358 = vmatprep.subr.mxu0 0.0
    %359 = vmatpush1.xpose.msra.mxu0 0.0
    %360 = vmatprep.subr.mxu0 0.0
    %361 = vmatpush1.xpose.msra.mxu0 0.0
    %362 = vmatprep.subr.mxu0 0.0
    %363 = vmatpush1.xpose.msra.mxu0 0.0
    %364 = vmatprep.subr.mxu0 0.0
    %365 = vmatpush1.xpose.msra.mxu0 0.0
    %366 = vmatprep.subr.mxu0 0.0
    %367 = vmatpush1.xpose.msra.mxu0 0.0
    %368 = vmatprep.subr.mxu0 0.0
    %369 = vmatpush1.xpose.msra.mxu0 %v338
    %370 = vmatprep.subr.mxu0 0.0
    %371 = vmatpush1.xpose.msra.mxu0 %v336
    %372 = vmatprep.subr.mxu0 0.0
    %373 = vmatpush2.xpose.msra.mxu0 0.0
    %374 = vmatprep.subr.mxu0 0.0
    %375 = vmatpush2.xpose.msra.mxu0 0.0
    %376 = vmatprep.subr.mxu0 0.0
    %377 = vmatpush2.xpose.msra.mxu0 0.0
    %378 = vmatprep.subr.mxu0 0.0
    %379 = vmatpush2.xpose.msra.mxu0 0.0
    %380 = vmatprep.subr.mxu0 0.0
    %381 = vmatpush2.xpose.msra.mxu0 0.0
    %382 = vmatprep.subr.mxu0 0.0
    %383 = vmatpush2.xpose.msra.mxu0 0.0
    %384 = vmatprep.subr.mxu0 0.0
    %385 = vmatpush2.xpose.msra.mxu0 0.0
    %386 = vmatprep.subr.mxu0 0.0
    %387 = vmatpush2.xpose.msra.mxu0 0.0
    %388 = vmatprep.subr.mxu0 0.0
    %389 = vmatpush2.xpose.msra.mxu0 0.0
    %390 = vmatprep.subr.mxu0 0.0
    %391 = vmatpush2.xpose.msra.mxu0 0.0
    %392 = vmatprep.subr.mxu0 0.0
    %393 = vmatpush2.xpose.msra.mxu0 0.0
    %394 = vmatprep.subr.mxu0 0.0
    %395 = vmatpush2.xpose.msra.mxu0 0.0
    %396 = vmatprep.subr.mxu0 0.0
    %397 = vmatpush2.xpose.msra.mxu0 0.0
    %398 = vmatprep.subr.mxu0 0.0
    %399 = vmatpush2.xpose.msra.mxu0 0.0
    %400 = vmatprep.subr.mxu0 0.0
    %401 = vmatpush2.xpose.msra.mxu0 0.0
    %402 = vmatprep.subr.mxu0 0.0
    %403 = vmatpush2.xpose.msra.mxu0 0.0
    %404 = vmatprep.mubr.f32.mxu0 0.0
    %405 = vmatmul.mubr.f32.gmra.mxu0 %v332
    %v406 = vpop.f32.mrf.mxu0
    %v407 = vadd.f32 0.0, %v406
    %v408 = vpop.f32.mrf.mxu0
    %409 = vmatprep.mubr.f32.mxu0 0.0
    %410 = vmatmul.mubr.f32.gmra.mxu0 %v334
    %v411 = vpop.f32.mrf.mxu0
    %v412 = vadd.f32 0.0, %v411
    %v413 = vpop.f32.mrf.mxu0
    %414 = vdwg.mxu0
    %v415 = vmul.f32 %v407, 0.25
    %v416 = vmul.f32 %v412, 0.25
    %v417 = vsel %vm135, %v415, -inf
    %418 = vmax.xlane.f32.xlu0 %v417
    %v419 = vpop.xlane.xlu0 %418
    %v420 = vsel %vm135, %v416, -inf
    %421 = vmax.xlane.f32.xlu0 %v420
    %v422 = vpop.xlane.xlu0 %421
    %v423 = vsub.f32 %v415, %v419
    %v424 = vsub.f32 %v416, %v422
    %v425 = vmul.f32 %v423, 1.442695
    %v426 = vpow.pop %v425
    %v427 = vmul.f32 %v424, 1.442695
    %v428 = vpow.pop %v427
    %v429 = vsel %vm135, %v426, 0.0
    %430 = vadd.xlane.f32.xlu0 %v429
    %v431 = vpop.xlane.xlu0 %430
    %v432 = vsel %vm135, %v428, 0.0
    %433 = vadd.xlane.f32.xlu0 %v432
    %v434 = vpop.xlane.xlu0 %433
    %v435 = vrcp.pop %v431
    %v436 = vmul.f32 %v426, %v435
    %v437 = vrcp.pop %v434
    %v438 = vmul.f32 %v428, %v437
    %441 = vrot.lane.b32.xlu0 %v109, 112
    %v442 = vpop.permute.xlu0 %441
    %443 = vrot.lane.b32.xlu0 %v115, 112
    %v444 = vpop.permute.xlu0 %443
    %v448 = vsel %vm135, %v436, 0
    %v451 = vsel %vm135, %v438, 0
    %453 = vmatprep.subr.mxu0 0.0
    %454 = vmatpush1.msra.mxu0 0.0
    %455 = vmatprep.subr.mxu0 0.0
    %456 = vmatpush1.msra.mxu0 0.0
    %457 = vmatprep.subr.mxu0 0.0
    %458 = vmatpush1.msra.mxu0 0.0
    %459 = vmatprep.subr.mxu0 0.0
    %460 = vmatpush1.msra.mxu0 0.0
    %461 = vmatprep.subr.mxu0 0.0
    %462 = vmatpush1.msra.mxu0 0.0
    %463 = vmatprep.subr.mxu0 0.0
    %464 = vmatpush1.msra.mxu0 0.0
    %465 = vmatprep.subr.mxu0 0.0
    %466 = vmatpush1.msra.mxu0 0.0
    %467 = vmatprep.subr.mxu0 0.0
    %468 = vmatpush1.msra.mxu0 0.0
    %469 = vmatprep.subr.mxu0 0.0
    %470 = vmatpush1.msra.mxu0 0.0
    %471 = vmatprep.subr.mxu0 0.0
    %472 = vmatpush1.msra.mxu0 0.0
    %473 = vmatprep.subr.mxu0 0.0
    %474 = vmatpush1.msra.mxu0 0.0
    %475 = vmatprep.subr.mxu0 0.0
    %476 = vmatpush1.msra.mxu0 0.0
    %477 = vmatprep.subr.mxu0 0.0
    %478 = vmatpush1.msra.mxu0 0.0
    %479 = vmatprep.subr.mxu0 0.0
    %480 = vmatpush1.msra.mxu0 0.0
    %481 = vmatprep.subr.mxu0 0.0
    %482 = vmatpush1.msra.mxu0 %v444
    %483 = vmatprep.subr.mxu0 0.0
    %484 = vmatpush1.msra.mxu0 %v442
    %485 = vmatprep.subr.mxu0 0.0
    %486 = vmatpush2.msra.mxu0 0.0
    %487 = vmatprep.subr.mxu0 0.0
    %488 = vmatpush2.msra.mxu0 0.0
    %489 = vmatprep.subr.mxu0 0.0
    %490 = vmatpush2.msra.mxu0 0.0
    %491 = vmatprep.subr.mxu0 0.0
    %492 = vmatpush2.msra.mxu0 0.0
    %493 = vmatprep.subr.mxu0 0.0
    %494 = vmatpush2.msra.mxu0 0.0
    %495 = vmatprep.subr.mxu0 0.0
    %496 = vmatpush2.msra.mxu0 0.0
    %497 = vmatprep.subr.mxu0 0.0
    %498 = vmatpush2.msra.mxu0 0.0
    %499 = vmatprep.subr.mxu0 0.0
    %500 = vmatpush2.msra.mxu0 0.0
    %501 = vmatprep.subr.mxu0 0.0
    %502 = vmatpush2.msra.mxu0 0.0
    %503 = vmatprep.subr.mxu0 0.0
    %504 = vmatpush2.msra.mxu0 0.0
    %505 = vmatprep.subr.mxu0 0.0
    %506 = vmatpush2.msra.mxu0 0.0
    %507 = vmatprep.subr.mxu0 0.0
    %508 = vmatpush2.msra.mxu0 0.0
    %509 = vmatprep.subr.mxu0 0.0
    %510 = vmatpush2.msra.mxu0 0.0
    %511 = vmatprep.subr.mxu0 0.0
    %512 = vmatpush2.msra.mxu0 0.0
    %513 = vmatprep.subr.mxu0 0.0
    %514 = vmatpush2.msra.mxu0 0.0
    %515 = vmatprep.subr.mxu0 0.0
    %516 = vmatpush2.msra.mxu0 0.0
    %517 = vmatprep.mubr.f32.mxu0 0.0
    %518 = vmatmul.mubr.f32.gmra.mxu0 %v448
    %v519 = vpop.f32.mrf.mxu0
    %v520 = vadd.f32 0.0, %v519
    %v521 = vpop.f32.mrf.mxu0
    %522 = vmatprep.mubr.f32.mxu0 0.0
    %523 = vmatmul.mubr.f32.gmra.mxu0 %v451
    %v524 = vpop.f32.mrf.mxu0
    %v525 = vadd.f32 0.0, %v524
    %v526 = vpop.f32.mrf.mxu0
    %527 = vdwg.mxu0
    %528 = vrot.lane.b32.xlu0 %v107, 96
    %v529 = vpop.permute.xlu0 %528
    %530 = vrot.lane.b32.xlu0 %v113, 96
    %v531 = vpop.permute.xlu0 %530
    %532 = vrot.lane.b32.xlu0 %v107, 32
    %v533 = vpop.permute.xlu0 %532
    %534 = vrot.lane.b32.xlu0 %v113, 32
    %v535 = vpop.permute.xlu0 %534
    %v536 = vsel %vm135, %v529, 0
    %v538 = vsel %vm135, %v531, 0
    %v540 = vsel %vm135, %v533, 0
    %v542 = vsel %vm135, %v535, 0
    %544 = vmatprep.subr.mxu0 0.0
    %545 = vmatpush1.xpose.msra.mxu0 0.0
    %546 = vmatprep.subr.mxu0 0.0
    %547 = vmatpush1.xpose.msra.mxu0 0.0
    %548 = vmatprep.subr.mxu0 0.0
    %549 = vmatpush1.xpose.msra.mxu0 0.0
    %550 = vmatprep.subr.mxu0 0.0
    %551 = vmatpush1.xpose.msra.mxu0 0.0
    %552 = vmatprep.subr.mxu0 0.0
    %553 = vmatpush1.xpose.msra.mxu0 0.0
    %554 = vmatprep.subr.mxu0 0.0
    %555 = vmatpush1.xpose.msra.mxu0 0.0
    %556 = vmatprep.subr.mxu0 0.0
    %557 = vmatpush1.xpose.msra.mxu0 0.0
    %558 = vmatprep.subr.mxu0 0.0
    %559 = vmatpush1.xpose.msra.mxu0 0.0
    %560 = vmatprep.subr.mxu0 0.0
    %561 = vmatpush1.xpose.msra.mxu0 0.0
    %562 = vmatprep.subr.mxu0 0.0
    %563 = vmatpush1.xpose.msra.mxu0 0.0
    %564 = vmatprep.subr.mxu0 0.0
    %565 = vmatpush1.xpose.msra.mxu0 0.0
    %566 = vmatprep.subr.mxu0 0.0
    %567 = vmatpush1.xpose.msra.mxu0 0.0
    %568 = vmatprep.subr.mxu0 0.0
    %569 = vmatpush1.xpose.msra.mxu0 0.0
    %570 = vmatprep.subr.mxu0 0.0
    %571 = vmatpush1.xpose.msra.mxu0 0.0
    %572 = vmatprep.subr.mxu0 0.0
    %573 = vmatpush1.xpose.msra.mxu0 %v542
    %574 = vmatprep.subr.mxu0 0.0
    %575 = vmatpush1.xpose.msra.mxu0 %v540
    %576 = vmatprep.subr.mxu0 0.0
    %577 = vmatpush2.xpose.msra.mxu0 0.0
    %578 = vmatprep.subr.mxu0 0.0
    %579 = vmatpush2.xpose.msra.mxu0 0.0
    %580 = vmatprep.subr.mxu0 0.0
    %581 = vmatpush2.xpose.msra.mxu0 0.0
    %582 = vmatprep.subr.mxu0 0.0
    %583 = vmatpush2.xpose.msra.mxu0 0.0
    %584 = vmatprep.subr.mxu0 0.0
    %585 = vmatpush2.xpose.msra.mxu0 0.0
    %586 = vmatprep.subr.mxu0 0.0
    %587 = vmatpush2.xpose.msra.mxu0 0.0
    %588 = vmatprep.subr.mxu0 0.0
    %589 = vmatpush2.xpose.msra.mxu0 0.0
    %590 = vmatprep.subr.mxu0 0.0
    %591 = vmatpush2.xpose.msra.mxu0 0.0
    %592 = vmatprep.subr.mxu0 0.0
    %593 = vmatpush2.xpose.msra.mxu0 0.0
    %594 = vmatprep.subr.mxu0 0.0
    %595 = vmatpush2.xpose.msra.mxu0 0.0
    %596 = vmatprep.subr.mxu0 0.0
    %597 = vmatpush2.xpose.msra.mxu0 0.0
    %598 = vmatprep.subr.mxu0 0.0
    %599 = vmatpush2.xpose.msra.mxu0 0.0
    %600 = vmatprep.subr.mxu0 0.0
    %601 = vmatpush2.xpose.msra.mxu0 0.0
    %602 = vmatprep.subr.mxu0 0.0
    %603 = vmatpush2.xpose.msra.mxu0 0.0
    %604 = vmatprep.subr.mxu0 0.0
    %605 = vmatpush2.xpose.msra.mxu0 0.0
    %606 = vmatprep.subr.mxu0 0.0
    %607 = vmatpush2.xpose.msra.mxu0 0.0
    %608 = vmatprep.mubr.f32.mxu0 0.0
    %609 = vmatmul.mubr.f32.gmra.mxu0 %v536
    %v610 = vpop.f32.mrf.mxu0
    %v611 = vadd.f32 0.0, %v610
    %v612 = vpop.f32.mrf.mxu0
    %613 = vmatprep.mubr.f32.mxu0 0.0
    %614 = vmatmul.mubr.f32.gmra.mxu0 %v538
    %v615 = vpop.f32.mrf.mxu0
    %v616 = vadd.f32 0.0, %v615
    %v617 = vpop.f32.mrf.mxu0
    %618 = vdwg.mxu0
    %v619 = vmul.f32 %v611, 0.25
    %v620 = vmul.f32 %v616, 0.25
    %v621 = vsel %vm135, %v619, -inf
    %622 = vmax.xlane.f32.xlu0 %v621
    %v623 = vpop.xlane.xlu0 %622
    %v624 = vsel %vm135, %v620, -inf
    %625 = vmax.xlane.f32.xlu0 %v624
    %v626 = vpop.xlane.xlu0 %625
    %v627 = vsub.f32 %v619, %v623
    %v628 = vsub.f32 %v620, %v626
    %v629 = vmul.f32 %v627, 1.442695
    %v630 = vpow.pop %v629
    %v631 = vmul.f32 %v628, 1.442695
    %v632 = vpow.pop %v631
    %v633 = vsel %vm135, %v630, 0.0
    %634 = vadd.xlane.f32.xlu0 %v633
    %v635 = vpop.xlane.xlu0 %634
    %v636 = vsel %vm135, %v632, 0.0
    %637 = vadd.xlane.f32.xlu0 %v636
    %v638 = vpop.xlane.xlu0 %637
    %v639 = vrcp.pop %v635
    %v640 = vmul.f32 %v630, %v639
    %v641 = vrcp.pop %v638
    %v642 = vmul.f32 %v632, %v641
    %643 = vrot.lane.b32.xlu0 %v109, 96
    %v644 = vpop.permute.xlu0 %643
    %645 = vrot.lane.b32.xlu0 %v115, 96
    %v646 = vpop.permute.xlu0 %645
    %v650 = vsel %vm135, %v640, 0
    %v653 = vsel %vm135, %v642, 0
    %655 = vmatprep.subr.mxu0 0.0
    %656 = vmatpush1.msra.mxu0 0.0
    %657 = vmatprep.subr.mxu0 0.0
    %658 = vmatpush1.msra.mxu0 0.0
    %659 = vmatprep.subr.mxu0 0.0
    %660 = vmatpush1.msra.mxu0 0.0
    %661 = vmatprep.subr.mxu0 0.0
    %662 = vmatpush1.msra.mxu0 0.0
    %663 = vmatprep.subr.mxu0 0.0
    %664 = vmatpush1.msra.mxu0 0.0
    %665 = vmatprep.subr.mxu0 0.0
    %666 = vmatpush1.msra.mxu0 0.0
    %667 = vmatprep.subr.mxu0 0.0
    %668 = vmatpush1.msra.mxu0 0.0
    %669 = vmatprep.subr.mxu0 0.0
    %670 = vmatpush1.msra.mxu0 0.0
    %671 = vmatprep.subr.mxu0 0.0
    %672 = vmatpush1.msra.mxu0 0.0
    %673 = vmatprep.subr.mxu0 0.0
    %674 = vmatpush1.msra.mxu0 0.0
    %675 = vmatprep.subr.mxu0 0.0
    %676 = vmatpush1.msra.mxu0 0.0
    %677 = vmatprep.subr.mxu0 0.0
    %678 = vmatpush1.msra.mxu0 0.0
    %679 = vmatprep.subr.mxu0 0.0
    %680 = vmatpush1.msra.mxu0 0.0
    %681 = vmatprep.subr.mxu0 0.0
    %682 = vmatpush1.msra.mxu0 0.0
    %683 = vmatprep.subr.mxu0 0.0
    %684 = vmatpush1.msra.mxu0 %v646
    %685 = vmatprep.subr.mxu0 0.0
    %686 = vmatpush1.msra.mxu0 %v644
    %687 = vmatprep.subr.mxu0 0.0
    %688 = vmatpush2.msra.mxu0 0.0
    %689 = vmatprep.subr.mxu0 0.0
    %690 = vmatpush2.msra.mxu0 0.0
    %691 = vmatprep.subr.mxu0 0.0
    %692 = vmatpush2.msra.mxu0 0.0
    %693 = vmatprep.subr.mxu0 0.0
    %694 = vmatpush2.msra.mxu0 0.0
    %695 = vmatprep.subr.mxu0 0.0
    %696 = vmatpush2.msra.mxu0 0.0
    %697 = vmatprep.subr.mxu0 0.0
    %698 = vmatpush2.msra.mxu0 0.0
    %699 = vmatprep.subr.mxu0 0.0
    %700 = vmatpush2.msra.mxu0 0.0
    %701 = vmatprep.subr.mxu0 0.0
    %702 = vmatpush2.msra.mxu0 0.0
    %703 = vmatprep.subr.mxu0 0.0
    %704 = vmatpush2.msra.mxu0 0.0
    %705 = vmatprep.subr.mxu0 0.0
    %706 = vmatpush2.msra.mxu0 0.0
    %707 = vmatprep.subr.mxu0 0.0
    %708 = vmatpush2.msra.mxu0 0.0
    %709 = vmatprep.subr.mxu0 0.0
    %710 = vmatpush2.msra.mxu0 0.0
    %711 = vmatprep.subr.mxu0 0.0
    %712 = vmatpush2.msra.mxu0 0.0
    %713 = vmatprep.subr.mxu0 0.0
    %714 = vmatpush2.msra.mxu0 0.0
    %715 = vmatprep.subr.mxu0 0.0
    %716 = vmatpush2.msra.mxu0 0.0
    %717 = vmatprep.subr.mxu0 0.0
    %718 = vmatpush2.msra.mxu0 0.0
    %719 = vmatprep.mubr.f32.mxu0 0.0
    %720 = vmatmul.mubr.f32.gmra.mxu0 %v650
    %v721 = vpop.f32.mrf.mxu0
    %v722 = vadd.f32 0.0, %v721
    %v723 = vpop.f32.mrf.mxu0
    %724 = vmatprep.mubr.f32.mxu0 0.0
    %725 = vmatmul.mubr.f32.gmra.mxu0 %v653
    %v726 = vpop.f32.mrf.mxu0
    %v727 = vadd.f32 0.0, %v726
    %v728 = vpop.f32.mrf.mxu0
    %729 = vdwg.mxu0
    %730 = vrot.lane.b32.xlu0 %v107, 80
    %v731 = vpop.permute.xlu0 %730
    %732 = vrot.lane.b32.xlu0 %v113, 80
    %v733 = vpop.permute.xlu0 %732
    %734 = vrot.lane.b32.xlu0 %v107, 16
    %v735 = vpop.permute.xlu0 %734
    %736 = vrot.lane.b32.xlu0 %v113, 16
    %v737 = vpop.permute.xlu0 %736
    %v738 = vsel %vm135, %v731, 0
    %v740 = vsel %vm135, %v733, 0
    %v742 = vsel %vm135, %v735, 0
    %v744 = vsel %vm135, %v737, 0
    %746 = vmatprep.subr.mxu0 0.0
    %747 = vmatpush1.xpose.msra.mxu0 0.0
    %748 = vmatprep.subr.mxu0 0.0
    %749 = vmatpush1.xpose.msra.mxu0 0.0
    %750 = vmatprep.subr.mxu0 0.0
    %751 = vmatpush1.xpose.msra.mxu0 0.0
    %752 = vmatprep.subr.mxu0 0.0
    %753 = vmatpush1.xpose.msra.mxu0 0.0
    %754 = vmatprep.subr.mxu0 0.0
    %755 = vmatpush1.xpose.msra.mxu0 0.0
    %756 = vmatprep.subr.mxu0 0.0
    %757 = vmatpush1.xpose.msra.mxu0 0.0
    %758 = vmatprep.subr.mxu0 0.0
    %759 = vmatpush1.xpose.msra.mxu0 0.0
    %760 = vmatprep.subr.mxu0 0.0
    %761 = vmatpush1.xpose.msra.mxu0 0.0
    %762 = vmatprep.subr.mxu0 0.0
    %763 = vmatpush1.xpose.msra.mxu0 0.0
    %764 = vmatprep.subr.mxu0 0.0
    %765 = vmatpush1.xpose.msra.mxu0 0.0
    %766 = vmatprep.subr.mxu0 0.0
    %767 = vmatpush1.xpose.msra.mxu0 0.0
    %768 = vmatprep.subr.mxu0 0.0
    %769 = vmatpush1.xpose.msra.mxu0 0.0
    %770 = vmatprep.subr.mxu0 0.0
    %771 = vmatpush1.xpose.msra.mxu0 0.0
    %772 = vmatprep.subr.mxu0 0.0
    %773 = vmatpush1.xpose.msra.mxu0 0.0
    %774 = vmatprep.subr.mxu0 0.0
    %775 = vmatpush1.xpose.msra.mxu0 %v744
    %776 = vmatprep.subr.mxu0 0.0
    %777 = vmatpush1.xpose.msra.mxu0 %v742
    %778 = vmatprep.subr.mxu0 0.0
    %779 = vmatpush2.xpose.msra.mxu0 0.0
    %780 = vmatprep.subr.mxu0 0.0
    %781 = vmatpush2.xpose.msra.mxu0 0.0
    %782 = vmatprep.subr.mxu0 0.0
    %783 = vmatpush2.xpose.msra.mxu0 0.0
    %784 = vmatprep.subr.mxu0 0.0
    %785 = vmatpush2.xpose.msra.mxu0 0.0
    %786 = vmatprep.subr.mxu0 0.0
    %787 = vmatpush2.xpose.msra.mxu0 0.0
    %788 = vmatprep.subr.mxu0 0.0
    %789 = vmatpush2.xpose.msra.mxu0 0.0
    %790 = vmatprep.subr.mxu0 0.0
    %791 = vmatpush2.xpose.msra.mxu0 0.0
    %792 = vmatprep.subr.mxu0 0.0
    %793 = vmatpush2.xpose.msra.mxu0 0.0
    %794 = vmatprep.subr.mxu0 0.0
    %795 = vmatpush2.xpose.msra.mxu0 0.0
    %796 = vmatprep.subr.mxu0 0.0
    %797 = vmatpush2.xpose.msra.mxu0 0.0
    %798 = vmatprep.subr.mxu0 0.0
    %799 = vmatpush2.xpose.msra.mxu0 0.0
    %800 = vmatprep.subr.mxu0 0.0
    %801 = vmatpush2.xpose.msra.mxu0 0.0
    %802 = vmatprep.subr.mxu0 0.0
    %803 = vmatpush2.xpose.msra.mxu0 0.0
    %804 = vmatprep.subr.mxu0 0.0
    %805 = vmatpush2.xpose.msra.mxu0 0.0
    %806 = vmatprep.subr.mxu0 0.0
    %807 = vmatpush2.xpose.msra.mxu0 0.0
    %808 = vmatprep.subr.mxu0 0.0
    %809 = vmatpush2.xpose.msra.mxu0 0.0
    %810 = vmatprep.mubr.f32.mxu0 0.0
    %811 = vmatmul.mubr.f32.gmra.mxu0 %v738
    %v812 = vpop.f32.mrf.mxu0
    %v813 = vadd.f32 0.0, %v812
    %v814 = vpop.f32.mrf.mxu0
    %815 = vmatprep.mubr.f32.mxu0 0.0
    %816 = vmatmul.mubr.f32.gmra.mxu0 %v740
    %v817 = vpop.f32.mrf.mxu0
    %v818 = vadd.f32 0.0, %v817
    %v819 = vpop.f32.mrf.mxu0
    %820 = vdwg.mxu0
    %v821 = vmul.f32 %v813, 0.25
    %v822 = vmul.f32 %v818, 0.25
    %v823 = vsel %vm135, %v821, -inf
    %824 = vmax.xlane.f32.xlu0 %v823
    %v825 = vpop.xlane.xlu0 %824
    %v826 = vsel %vm135, %v822, -inf
    %827 = vmax.xlane.f32.xlu0 %v826
    %v828 = vpop.xlane.xlu0 %827
    %v829 = vsub.f32 %v821, %v825
    %v830 = vsub.f32 %v822, %v828
    %v831 = vmul.f32 %v829, 1.442695
    %v832 = vpow.pop %v831
    %v833 = vmul.f32 %v830, 1.442695
    %v834 = vpow.pop %v833
    %v835 = vsel %vm135, %v832, 0.0
    %836 = vadd.xlane.f32.xlu0 %v835
    %v837 = vpop.xlane.xlu0 %836
    %v838 = vsel %vm135, %v834, 0.0
    %839 = vadd.xlane.f32.xlu0 %v838
    %v840 = vpop.xlane.xlu0 %839
    %v841 = vrcp.pop %v837
    %v842 = vmul.f32 %v832, %v841
    %v843 = vrcp.pop %v840
    %v844 = vmul.f32 %v834, %v843
    %845 = vrot.lane.b32.xlu0 %v109, 80
    %v846 = vpop.permute.xlu0 %845
    %847 = vrot.lane.b32.xlu0 %v115, 80
    %v848 = vpop.permute.xlu0 %847
    %v852 = vsel %vm135, %v842, 0
    %v855 = vsel %vm135, %v844, 0
    %857 = vmatprep.subr.mxu0 0.0
    %858 = vmatpush1.msra.mxu0 0.0
    %859 = vmatprep.subr.mxu0 0.0
    %860 = vmatpush1.msra.mxu0 0.0
    %861 = vmatprep.subr.mxu0 0.0
    %862 = vmatpush1.msra.mxu0 0.0
    %863 = vmatprep.subr.mxu0 0.0
    %864 = vmatpush1.msra.mxu0 0.0
    %865 = vmatprep.subr.mxu0 0.0
    %866 = vmatpush1.msra.mxu0 0.0
    %867 = vmatprep.subr.mxu0 0.0
    %868 = vmatpush1.msra.mxu0 0.0
    %869 = vmatprep.subr.mxu0 0.0
    %870 = vmatpush1.msra.mxu0 0.0
    %871 = vmatprep.subr.mxu0 0.0
    %872 = vmatpush1.msra.mxu0 0.0
    %873 = vmatprep.subr.mxu0 0.0
    %874 = vmatpush1.msra.mxu0 0.0
    %875 = vmatprep.subr.mxu0 0.0
    %876 = vmatpush1.msra.mxu0 0.0
    %877 = vmatprep.subr.mxu0 0.0
    %878 = vmatpush1.msra.mxu0 0.0
    %879 = vmatprep.subr.mxu0 0.0
    %880 = vmatpush1.msra.mxu0 0.0
    %881 = vmatprep.subr.mxu0 0.0
    %882 = vmatpush1.msra.mxu0 0.0
    %883 = vmatprep.subr.mxu0 0.0
    %884 = vmatpush1.msra.mxu0 0.0
    %885 = vmatprep.subr.mxu0 0.0
    %886 = vmatpush1.msra.mxu0 %v848
    %887 = vmatprep.subr.mxu0 0.0
    %888 = vmatpush1.msra.mxu0 %v846
    %889 = vmatprep.subr.mxu0 0.0
    %890 = vmatpush2.msra.mxu0 0.0
    %891 = vmatprep.subr.mxu0 0.0
    %892 = vmatpush2.msra.mxu0 0.0
    %893 = vmatprep.subr.mxu0 0.0
    %894 = vmatpush2.msra.mxu0 0.0
    %895 = vmatprep.subr.mxu0 0.0
    %896 = vmatpush2.msra.mxu0 0.0
    %897 = vmatprep.subr.mxu0 0.0
    %898 = vmatpush2.msra.mxu0 0.0
    %899 = vmatprep.subr.mxu0 0.0
    %900 = vmatpush2.msra.mxu0 0.0
    %901 = vmatprep.subr.mxu0 0.0
    %902 = vmatpush2.msra.mxu0 0.0
    %903 = vmatprep.subr.mxu0 0.0
    %904 = vmatpush2.msra.mxu0 0.0
    %905 = vmatprep.subr.mxu0 0.0
    %906 = vmatpush2.msra.mxu0 0.0
    %907 = vmatprep.subr.mxu0 0.0
    %908 = vmatpush2.msra.mxu0 0.0
    %909 = vmatprep.subr.mxu0 0.0
    %910 = vmatpush2.msra.mxu0 0.0
    %911 = vmatprep.subr.mxu0 0.0
    %912 = vmatpush2.msra.mxu0 0.0
    %913 = vmatprep.subr.mxu0 0.0
    %914 = vmatpush2.msra.mxu0 0.0
    %915 = vmatprep.subr.mxu0 0.0
    %916 = vmatpush2.msra.mxu0 0.0
    %917 = vmatprep.subr.mxu0 0.0
    %918 = vmatpush2.msra.mxu0 0.0
    %919 = vmatprep.subr.mxu0 0.0
    %920 = vmatpush2.msra.mxu0 0.0
    %921 = vmatprep.mubr.f32.mxu0 0.0
    %922 = vmatmul.mubr.f32.gmra.mxu0 %v852
    %v923 = vpop.f32.mrf.mxu0
    %v924 = vadd.f32 0.0, %v923
    %v925 = vpop.f32.mrf.mxu0
    %926 = vmatprep.mubr.f32.mxu0 0.0
    %927 = vmatmul.mubr.f32.gmra.mxu0 %v855
    %v928 = vpop.f32.mrf.mxu0
    %v929 = vadd.f32 0.0, %v928
    %v930 = vpop.f32.mrf.mxu0
    %931 = vdwg.mxu0
    %934 = vrot.lane.b32.xlu0 %v520, 16
    %v935 = vpop.permute.xlu0 %934
    %936 = vrot.lane.b32.xlu0 %v525, 16
    %v937 = vpop.permute.xlu0 %936
    %942 = vrot.lane.b32.xlu0 %v722, 32
    %v943 = vpop.permute.xlu0 %942
    %944 = vrot.lane.b32.xlu0 %v727, 32
    %v945 = vpop.permute.xlu0 %944
    %950 = vrot.lane.b32.xlu0 %v924, 48
    %v951 = vpop.permute.xlu0 %950
    %952 = vrot.lane.b32.xlu0 %v929, 48
    %v953 = vpop.permute.xlu0 %952
    %v956 = vsel %vm135, %v316, %v935
    %v957 = vsel %vm135, %v321, %v937
    %v958 = vsel %vm27, %v956, %v943
    %v959 = vsel %vm27, %v957, %v945
    %vm960 = vcmask 392192
    %v961 = vsel %vm960, %v958, %v951
    %v962 = vsel %vm960, %v959, %v953
    %965 = vrot.lane.b32.xlu0 %v119, 64
    %v966 = vpop.permute.xlu0 %965
    %967 = vrot.lane.b32.xlu0 %v125, 64
    %v968 = vpop.permute.xlu0 %967
    %v969 = vsel %vm135, %v119, 0
    %v971 = vsel %vm135, %v125, 0
    %v973 = vsel %vm135, %v966, 0
    %v975 = vsel %vm135, %v968, 0
    %977 = vmatprep.subr.mxu0 0.0
    %978 = vmatpush1.xpose.msra.mxu0 0.0
    %979 = vmatprep.subr.mxu0 0.0
    %980 = vmatpush1.xpose.msra.mxu0 0.0
    %981 = vmatprep.subr.mxu0 0.0
    %982 = vmatpush1.xpose.msra.mxu0 0.0
    %983 = vmatprep.subr.mxu0 0.0
    %984 = vmatpush1.xpose.msra.mxu0 0.0
    %985 = vmatprep.subr.mxu0 0.0
    %986 = vmatpush1.xpose.msra.mxu0 0.0
    %987 = vmatprep.subr.mxu0 0.0
    %988 = vmatpush1.xpose.msra.mxu0 0.0
    %989 = vmatprep.subr.mxu0 0.0
    %990 = vmatpush1.xpose.msra.mxu0 0.0
    %991 = vmatprep.subr.mxu0 0.0
    %992 = vmatpush1.xpose.msra.mxu0 0.0
    %993 = vmatprep.subr.mxu0 0.0
    %994 = vmatpush1.xpose.msra.mxu0 0.0
    %995 = vmatprep.subr.mxu0 0.0
    %996 = vmatpush1.xpose.msra.mxu0 0.0
    %997 = vmatprep.subr.mxu0 0.0
    %998 = vmatpush1.xpose.msra.mxu0 0.0
    %999 = vmatprep.subr.mxu0 0.0
    %1000 = vmatpush1.xpose.msra.mxu0 0.0
    %1001 = vmatprep.subr.mxu0 0.0
    %1002 = vmatpush1.xpose.msra.mxu0 0.0
    %1003 = vmatprep.subr.mxu0 0.0
    %1004 = vmatpush1.xpose.msra.mxu0 0.0
    %1005 = vmatprep.subr.mxu0 0.0
    %1006 = vmatpush1.xpose.msra.mxu0 %v975
    %1007 = vmatprep.subr.mxu0 0.0
    %1008 = vmatpush1.xpose.msra.mxu0 %v973
    %1009 = vmatprep.subr.mxu0 0.0
    %1010 = vmatpush2.xpose.msra.mxu0 0.0
    %1011 = vmatprep.subr.mxu0 0.0
    %1012 = vmatpush2.xpose.msra.mxu0 0.0
    %1013 = vmatprep.subr.mxu0 0.0
    %1014 = vmatpush2.xpose.msra.mxu0 0.0
    %1015 = vmatprep.subr.mxu0 0.0
    %1016 = vmatpush2.xpose.msra.mxu0 0.0
    %1017 = vmatprep.subr.mxu0 0.0
    %1018 = vmatpush2.xpose.msra.mxu0 0.0
    %1019 = vmatprep.subr.mxu0 0.0
    %1020 = vmatpush2.xpose.msra.mxu0 0.0
    %1021 = vmatprep.subr.mxu0 0.0
    %1022 = vmatpush2.xpose.msra.mxu0 0.0
    %1023 = vmatprep.subr.mxu0 0.0
    %1024 = vmatpush2.xpose.msra.mxu0 0.0
    %1025 = vmatprep.subr.mxu0 0.0
    %1026 = vmatpush2.xpose.msra.mxu0 0.0
    %1027 = vmatprep.subr.mxu0 0.0
    %1028 = vmatpush2.xpose.msra.mxu0 0.0
    %1029 = vmatprep.subr.mxu0 0.0
    %1030 = vmatpush2.xpose.msra.mxu0 0.0
    %1031 = vmatprep.subr.mxu0 0.0
    %1032 = vmatpush2.xpose.msra.mxu0 0.0
    %1033 = vmatprep.subr.mxu0 0.0
    %1034 = vmatpush2.xpose.msra.mxu0 0.0
    %1035 = vmatprep.subr.mxu0 0.0
    %1036 = vmatpush2.xpose.msra.mxu0 0.0
    %1037 = vmatprep.subr.mxu0 0.0
    %1038 = vmatpush2.xpose.msra.mxu0 0.0
    %1039 = vmatprep.subr.mxu0 0.0
    %1040 = vmatpush2.xpose.msra.mxu0 0.0
    %1041 = vmatprep.mubr.f32.mxu0 0.0
    %1042 = vmatmul.mubr.f32.gmra.mxu0 %v969
    %v1043 = vpop.f32.mrf.mxu0
    %v1044 = vadd.f32 0.0, %v1043
    %v1045 = vpop.f32.mrf.mxu0
    %1046 = vmatprep.mubr.f32.mxu0 0.0
    %1047 = vmatmul.mubr.f32.gmra.mxu0 %v971
    %v1048 = vpop.f32.mrf.mxu0
    %v1049 = vadd.f32 0.0, %v1048
    %v1050 = vpop.f32.mrf.mxu0
    %1051 = vdwg.mxu0
    %v1052 = vmul.f32 %v1044, 0.25
    %v1053 = vmul.f32 %v1049, 0.25
    %v1054 = vsel %vm135, %v1052, -inf
    %1055 = vmax.xlane.f32.xlu0 %v1054
    %v1056 = vpop.xlane.xlu0 %1055
    %v1057 = vsel %vm135, %v1053, -inf
    %1058 = vmax.xlane.f32.xlu0 %v1057
    %v1059 = vpop.xlane.xlu0 %1058
    %v1060 = vsub.f32 %v1052, %v1056
    %v1061 = vsub.f32 %v1053, %v1059
    %v1062 = vmul.f32 %v1060, 1.442695
    %v1063 = vpow.pop %v1062
    %v1064 = vmul.f32 %v1061, 1.442695
    %v1065 = vpow.pop %v1064
    %v1066 = vsel %vm135, %v1063, 0.0
    %1067 = vadd.xlane.f32.xlu0 %v1066
    %v1068 = vpop.xlane.xlu0 %1067
    %v1069 = vsel %vm135, %v1065, 0.0
    %1070 = vadd.xlane.f32.xlu0 %v1069
    %v1071 = vpop.xlane.xlu0 %1070
    %v1072 = vrcp.pop %v1068
    %v1073 = vmul.f32 %v1063, %v1072
    %v1074 = vrcp.pop %v1071
    %v1075 = vmul.f32 %v1065, %v1074
    %v1077 = vsel %vm135, %v1073, 0
    %v1080 = vsel %vm135, %v1075, 0
    %1082 = vmatprep.subr.mxu0 0.0
    %1083 = vmatpush1.msra.mxu0 0.0
    %1084 = vmatprep.subr.mxu0 0.0
    %1085 = vmatpush1.msra.mxu0 0.0
    %1086 = vmatprep.subr.mxu0 0.0
    %1087 = vmatpush1.msra.mxu0 0.0
    %1088 = vmatprep.subr.mxu0 0.0
    %1089 = vmatpush1.msra.mxu0 0.0
    %1090 = vmatprep.subr.mxu0 0.0
    %1091 = vmatpush1.msra.mxu0 0.0
    %1092 = vmatprep.subr.mxu0 0.0
    %1093 = vmatpush1.msra.mxu0 0.0
    %1094 = vmatprep.subr.mxu0 0.0
    %1095 = vmatpush1.msra.mxu0 0.0
    %1096 = vmatprep.subr.mxu0 0.0
    %1097 = vmatpush1.msra.mxu0 0.0
    %1098 = vmatprep.subr.mxu0 0.0
    %1099 = vmatpush1.msra.mxu0 0.0
    %1100 = vmatprep.subr.mxu0 0.0
    %1101 = vmatpush1.msra.mxu0 0.0
    %1102 = vmatprep.subr.mxu0 0.0
    %1103 = vmatpush1.msra.mxu0 0.0
    %1104 = vmatprep.subr.mxu0 0.0
    %1105 = vmatpush1.msra.mxu0 0.0
    %1106 = vmatprep.subr.mxu0 0.0
    %1107 = vmatpush1.msra.mxu0 0.0
    %1108 = vmatprep.subr.mxu0 0.0
    %1109 = vmatpush1.msra.mxu0 0.0
    %1110 = vmatprep.subr.mxu0 0.0
    %1111 = vmatpush1.msra.mxu0 %v127
    %1112 = vmatprep.subr.mxu0 0.0
    %1113 = vmatpush1.msra.mxu0 %v121
    %1114 = vmatprep.subr.mxu0 0.0
    %1115 = vmatpush2.msra.mxu0 0.0
    %1116 = vmatprep.subr.mxu0 0.0
    %1117 = vmatpush2.msra.mxu0 0.0
    %1118 = vmatprep.subr.mxu0 0.0
    %1119 = vmatpush2.msra.mxu0 0.0
    %1120 = vmatprep.subr.mxu0 0.0
    %1121 = vmatpush2.msra.mxu0 0.0
    %1122 = vmatprep.subr.mxu0 0.0
    %1123 = vmatpush2.msra.mxu0 0.0
    %1124 = vmatprep.subr.mxu0 0.0
    %1125 = vmatpush2.msra.mxu0 0.0
    %1126 = vmatprep.subr.mxu0 0.0
    %1127 = vmatpush2.msra.mxu0 0.0
    %1128 = vmatprep.subr.mxu0 0.0
    %1129 = vmatpush2.msra.mxu0 0.0
    %1130 = vmatprep.subr.mxu0 0.0
    %1131 = vmatpush2.msra.mxu0 0.0
    %1132 = vmatprep.subr.mxu0 0.0
    %1133 = vmatpush2.msra.mxu0 0.0
    %1134 = vmatprep.subr.mxu0 0.0
    %1135 = vmatpush2.msra.mxu0 0.0
    %1136 = vmatprep.subr.mxu0 0.0
    %1137 = vmatpush2.msra.mxu0 0.0
    %1138 = vmatprep.subr.mxu0 0.0
    %1139 = vmatpush2.msra.mxu0 0.0
    %1140 = vmatprep.subr.mxu0 0.0
    %1141 = vmatpush2.msra.mxu0 0.0
    %1142 = vmatprep.subr.mxu0 0.0
    %1143 = vmatpush2.msra.mxu0 0.0
    %1144 = vmatprep.subr.mxu0 0.0
    %1145 = vmatpush2.msra.mxu0 0.0
    %1146 = vmatprep.mubr.f32.mxu0 0.0
    %1147 = vmatmul.mubr.f32.gmra.mxu0 %v1077
    %v1148 = vpop.f32.mrf.mxu0
    %v1149 = vadd.f32 0.0, %v1148
    %v1150 = vpop.f32.mrf.mxu0
    %1151 = vmatprep.mubr.f32.mxu0 0.0
    %1152 = vmatmul.mubr.f32.gmra.mxu0 %v1080
    %v1153 = vpop.f32.mrf.mxu0
    %v1154 = vadd.f32 0.0, %v1153
    %v1155 = vpop.f32.mrf.mxu0
    %1156 = vdwg.mxu0
    %1157 = vrot.lane.b32.xlu0 %v119, 112
    %v1158 = vpop.permute.xlu0 %1157
    %1159 = vrot.lane.b32.xlu0 %v125, 112
    %v1160 = vpop.permute.xlu0 %1159
    %1161 = vrot.lane.b32.xlu0 %v119, 48
    %v1162 = vpop.permute.xlu0 %1161
    %1163 = vrot.lane.b32.xlu0 %v125, 48
    %v1164 = vpop.permute.xlu0 %1163
    %v1165 = vsel %vm135, %v1158, 0
    %v1167 = vsel %vm135, %v1160, 0
    %v1169 = vsel %vm135, %v1162, 0
    %v1171 = vsel %vm135, %v1164, 0
    %1173 = vmatprep.subr.mxu0 0.0
    %1174 = vmatpush1.xpose.msra.mxu0 0.0
    %1175 = vmatprep.subr.mxu0 0.0
    %1176 = vmatpush1.xpose.msra.mxu0 0.0
    %1177 = vmatprep.subr.mxu0 0.0
    %1178 = vmatpush1.xpose.msra.mxu0 0.0
    %1179 = vmatprep.subr.mxu0 0.0
    %1180 = vmatpush1.xpose.msra.mxu0 0.0
    %1181 = vmatprep.subr.mxu0 0.0
    %1182 = vmatpush1.xpose.msra.mxu0 0.0
    %1183 = vmatprep.subr.mxu0 0.0
    %1184 = vmatpush1.xpose.msra.mxu0 0.0
    %1185 = vmatprep.subr.mxu0 0.0
    %1186 = vmatpush1.xpose.msra.mxu0 0.0
    %1187 = vmatprep.subr.mxu0 0.0
    %1188 = vmatpush1.xpose.msra.mxu0 0.0
    %1189 = vmatprep.subr.mxu0 0.0
    %1190 = vmatpush1.xpose.msra.mxu0 0.0
    %1191 = vmatprep.subr.mxu0 0.0
    %1192 = vmatpush1.xpose.msra.mxu0 0.0
    %1193 = vmatprep.subr.mxu0 0.0
    %1194 = vmatpush1.xpose.msra.mxu0 0.0
    %1195 = vmatprep.subr.mxu0 0.0
    %1196 = vmatpush1.xpose.msra.mxu0 0.0
    %1197 = vmatprep.subr.mxu0 0.0
    %1198 = vmatpush1.xpose.msra.mxu0 0.0
    %1199 = vmatprep.subr.mxu0 0.0
    %1200 = vmatpush1.xpose.msra.mxu0 0.0
    %1201 = vmatprep.subr.mxu0 0.0
    %1202 = vmatpush1.xpose.msra.mxu0 %v1171
    %1203 = vmatprep.subr.mxu0 0.0
    %1204 = vmatpush1.xpose.msra.mxu0 %v1169
    %1205 = vmatprep.subr.mxu0 0.0
    %1206 = vmatpush2.xpose.msra.mxu0 0.0
    %1207 = vmatprep.subr.mxu0 0.0
    %1208 = vmatpush2.xpose.msra.mxu0 0.0
    %1209 = vmatprep.subr.mxu0 0.0
    %1210 = vmatpush2.xpose.msra.mxu0 0.0
    %1211 = vmatprep.subr.mxu0 0.0
    %1212 = vmatpush2.xpose.msra.mxu0 0.0
    %1213 = vmatprep.subr.mxu0 0.0
    %1214 = vmatpush2.xpose.msra.mxu0 0.0
    %1215 = vmatprep.subr.mxu0 0.0
    %1216 = vmatpush2.xpose.msra.mxu0 0.0
    %1217 = vmatprep.subr.mxu0 0.0
    %1218 = vmatpush2.xpose.msra.mxu0 0.0
    %1219 = vmatprep.subr.mxu0 0.0
    %1220 = vmatpush2.xpose.msra.mxu0 0.0
    %1221 = vmatprep.subr.mxu0 0.0
    %1222 = vmatpush2.xpose.msra.mxu0 0.0
    %1223 = vmatprep.subr.mxu0 0.0
    %1224 = vmatpush2.xpose.msra.mxu0 0.0
    %1225 = vmatprep.subr.mxu0 0.0
    %1226 = vmatpush2.xpose.msra.mxu0 0.0
    %1227 = vmatprep.subr.mxu0 0.0
    %1228 = vmatpush2.xpose.msra.mxu0 0.0
    %1229 = vmatprep.subr.mxu0 0.0
    %1230 = vmatpush2.xpose.msra.mxu0 0.0
    %1231 = vmatprep.subr.mxu0 0.0
    %1232 = vmatpush2.xpose.msra.mxu0 0.0
    %1233 = vmatprep.subr.mxu0 0.0
    %1234 = vmatpush2.xpose.msra.mxu0 0.0
    %1235 = vmatprep.subr.mxu0 0.0
    %1236 = vmatpush2.xpose.msra.mxu0 0.0
    %1237 = vmatprep.mubr.f32.mxu0 0.0
    %1238 = vmatmul.mubr.f32.gmra.mxu0 %v1165
    %v1239 = vpop.f32.mrf.mxu0
    %v1240 = vadd.f32 0.0, %v1239
    %v1241 = vpop.f32.mrf.mxu0
    %1242 = vmatprep.mubr.f32.mxu0 0.0
    %1243 = vmatmul.mubr.f32.gmra.mxu0 %v1167
    %v1244 = vpop.f32.mrf.mxu0
    %v1245 = vadd.f32 0.0, %v1244
    %v1246 = vpop.f32.mrf.mxu0
    %1247 = vdwg.mxu0
    %v1248 = vmul.f32 %v1240, 0.25
    %v1249 = vmul.f32 %v1245, 0.25
    %v1250 = vsel %vm135, %v1248, -inf
    %1251 = vmax.xlane.f32.xlu0 %v1250
    %v1252 = vpop.xlane.xlu0 %1251
    %v1253 = vsel %vm135, %v1249, -inf
    %1254 = vmax.xlane.f32.xlu0 %v1253
    %v1255 = vpop.xlane.xlu0 %1254
    %v1256 = vsub.f32 %v1248, %v1252
    %v1257 = vsub.f32 %v1249, %v1255
    %v1258 = vmul.f32 %v1256, 1.442695
    %v1259 = vpow.pop %v1258
    %v1260 = vmul.f32 %v1257, 1.442695
    %v1261 = vpow.pop %v1260
    %v1262 = vsel %vm135, %v1259, 0.0
    %1263 = vadd.xlane.f32.xlu0 %v1262
    %v1264 = vpop.xlane.xlu0 %1263
    %v1265 = vsel %vm135, %v1261, 0.0
    %1266 = vadd.xlane.f32.xlu0 %v1265
    %v1267 = vpop.xlane.xlu0 %1266
    %v1268 = vrcp.pop %v1264
    %v1269 = vmul.f32 %v1259, %v1268
    %v1270 = vrcp.pop %v1267
    %v1271 = vmul.f32 %v1261, %v1270
    %1274 = vrot.lane.b32.xlu0 %v121, 112
    %v1275 = vpop.permute.xlu0 %1274
    %1276 = vrot.lane.b32.xlu0 %v127, 112
    %v1277 = vpop.permute.xlu0 %1276
    %v1281 = vsel %vm135, %v1269, 0
    %v1284 = vsel %vm135, %v1271, 0
    %1286 = vmatprep.subr.mxu0 0.0
    %1287 = vmatpush1.msra.mxu0 0.0
    %1288 = vmatprep.subr.mxu0 0.0
    %1289 = vmatpush1.msra.mxu0 0.0
    %1290 = vmatprep.subr.mxu0 0.0
    %1291 = vmatpush1.msra.mxu0 0.0
    %1292 = vmatprep.subr.mxu0 0.0
    %1293 = vmatpush1.msra.mxu0 0.0
    %1294 = vmatprep.subr.mxu0 0.0
    %1295 = vmatpush1.msra.mxu0 0.0
    %1296 = vmatprep.subr.mxu0 0.0
    %1297 = vmatpush1.msra.mxu0 0.0
    %1298 = vmatprep.subr.mxu0 0.0
    %1299 = vmatpush1.msra.mxu0 0.0
    %1300 = vmatprep.subr.mxu0 0.0
    %1301 = vmatpush1.msra.mxu0 0.0
    %1302 = vmatprep.subr.mxu0 0.0
    %1303 = vmatpush1.msra.mxu0 0.0
    %1304 = vmatprep.subr.mxu0 0.0
    %1305 = vmatpush1.msra.mxu0 0.0
    %1306 = vmatprep.subr.mxu0 0.0
    %1307 = vmatpush1.msra.mxu0 0.0
    %1308 = vmatprep.subr.mxu0 0.0
    %1309 = vmatpush1.msra.mxu0 0.0
    %1310 = vmatprep.subr.mxu0 0.0
    %1311 = vmatpush1.msra.mxu0 0.0
    %1312 = vmatprep.subr.mxu0 0.0
    %1313 = vmatpush1.msra.mxu0 0.0
    %1314 = vmatprep.subr.mxu0 0.0
    %1315 = vmatpush1.msra.mxu0 %v1277
    %1316 = vmatprep.subr.mxu0 0.0
    %1317 = vmatpush1.msra.mxu0 %v1275
    %1318 = vmatprep.subr.mxu0 0.0
    %1319 = vmatpush2.msra.mxu0 0.0
    %1320 = vmatprep.subr.mxu0 0.0
    %1321 = vmatpush2.msra.mxu0 0.0
    %1322 = vmatprep.subr.mxu0 0.0
    %1323 = vmatpush2.msra.mxu0 0.0
    %1324 = vmatprep.subr.mxu0 0.0
    %1325 = vmatpush2.msra.mxu0 0.0
    %1326 = vmatprep.subr.mxu0 0.0
    %1327 = vmatpush2.msra.mxu0 0.0
    %1328 = vmatprep.subr.mxu0 0.0
    %1329 = vmatpush2.msra.mxu0 0.0
    %1330 = vmatprep.subr.mxu0 0.0
    %1331 = vmatpush2.msra.mxu0 0.0
    %1332 = vmatprep.subr.mxu0 0.0
    %1333 = vmatpush2.msra.mxu0 0.0
    %1334 = vmatprep.subr.mxu0 0.0
    %1335 = vmatpush2.msra.mxu0 0.0
    %1336 = vmatprep.subr.mxu0 0.0
    %1337 = vmatpush2.msra.mxu0 0.0
    %1338 = vmatprep.subr.mxu0 0.0
    %1339 = vmatpush2.msra.mxu0 0.0
    %1340 = vmatprep.subr.mxu0 0.0
    %1341 = vmatpush2.msra.mxu0 0.0
    %1342 = vmatprep.subr.mxu0 0.0
    %1343 = vmatpush2.msra.mxu0 0.0
    %1344 = vmatprep.subr.mxu0 0.0
    %1345 = vmatpush2.msra.mxu0 0.0
    %1346 = vmatprep.subr.mxu0 0.0
    %1347 = vmatpush2.msra.mxu0 0.0
    %1348 = vmatprep.subr.mxu0 0.0
    %1349 = vmatpush2.msra.mxu0 0.0
    %1350 = vmatprep.mubr.f32.mxu0 0.0
    %1351 = vmatmul.mubr.f32.gmra.mxu0 %v1281
    %v1352 = vpop.f32.mrf.mxu0
    %v1353 = vadd.f32 0.0, %v1352
    %v1354 = vpop.f32.mrf.mxu0
    %1355 = vmatprep.mubr.f32.mxu0 0.0
    %1356 = vmatmul.mubr.f32.gmra.mxu0 %v1284
    %v1357 = vpop.f32.mrf.mxu0
    %v1358 = vadd.f32 0.0, %v1357
    %v1359 = vpop.f32.mrf.mxu0
    %1360 = vdwg.mxu0
    %1361 = vrot.lane.b32.xlu0 %v119, 96
    %v1362 = vpop.permute.xlu0 %1361
    %1363 = vrot.lane.b32.xlu0 %v125, 96
    %v1364 = vpop.permute.xlu0 %1363
    %1365 = vrot.lane.b32.xlu0 %v119, 32
    %v1366 = vpop.permute.xlu0 %1365
    %1367 = vrot.lane.b32.xlu0 %v125, 32
    %v1368 = vpop.permute.xlu0 %1367
    %v1369 = vsel %vm135, %v1362, 0
    %v1371 = vsel %vm135, %v1364, 0
    %v1373 = vsel %vm135, %v1366, 0
    %v1375 = vsel %vm135, %v1368, 0
    %1377 = vmatprep.subr.mxu0 0.0
    %1378 = vmatpush1.xpose.msra.mxu0 0.0
    %1379 = vmatprep.subr.mxu0 0.0
    %1380 = vmatpush1.xpose.msra.mxu0 0.0
    %1381 = vmatprep.subr.mxu0 0.0
    %1382 = vmatpush1.xpose.msra.mxu0 0.0
    %1383 = vmatprep.subr.mxu0 0.0
    %1384 = vmatpush1.xpose.msra.mxu0 0.0
    %1385 = vmatprep.subr.mxu0 0.0
    %1386 = vmatpush1.xpose.msra.mxu0 0.0
    %1387 = vmatprep.subr.mxu0 0.0
    %1388 = vmatpush1.xpose.msra.mxu0 0.0
    %1389 = vmatprep.subr.mxu0 0.0
    %1390 = vmatpush1.xpose.msra.mxu0 0.0
    %1391 = vmatprep.subr.mxu0 0.0
    %1392 = vmatpush1.xpose.msra.mxu0 0.0
    %1393 = vmatprep.subr.mxu0 0.0
    %1394 = vmatpush1.xpose.msra.mxu0 0.0
    %1395 = vmatprep.subr.mxu0 0.0
    %1396 = vmatpush1.xpose.msra.mxu0 0.0
    %1397 = vmatprep.subr.mxu0 0.0
    %1398 = vmatpush1.xpose.msra.mxu0 0.0
    %1399 = vmatprep.subr.mxu0 0.0
    %1400 = vmatpush1.xpose.msra.mxu0 0.0
    %1401 = vmatprep.subr.mxu0 0.0
    %1402 = vmatpush1.xpose.msra.mxu0 0.0
    %1403 = vmatprep.subr.mxu0 0.0
    %1404 = vmatpush1.xpose.msra.mxu0 0.0
    %1405 = vmatprep.subr.mxu0 0.0
    %1406 = vmatpush1.xpose.msra.mxu0 %v1375
    %1407 = vmatprep.subr.mxu0 0.0
    %1408 = vmatpush1.xpose.msra.mxu0 %v1373
    %1409 = vmatprep.subr.mxu0 0.0
    %1410 = vmatpush2.xpose.msra.mxu0 0.0
    %1411 = vmatprep.subr.mxu0 0.0
    %1412 = vmatpush2.xpose.msra.mxu0 0.0
    %1413 = vmatprep.subr.mxu0 0.0
    %1414 = vmatpush2.xpose.msra.mxu0 0.0
    %1415 = vmatprep.subr.mxu0 0.0
    %1416 = vmatpush2.xpose.msra.mxu0 0.0
    %1417 = vmatprep.subr.mxu0 0.0
    %1418 = vmatpush2.xpose.msra.mxu0 0.0
    %1419 = vmatprep.subr.mxu0 0.0
    %1420 = vmatpush2.xpose.msra.mxu0 0.0
    %1421 = vmatprep.subr.mxu0 0.0
    %1422 = vmatpush2.xpose.msra.mxu0 0.0
    %1423 = vmatprep.subr.mxu0 0.0
    %1424 = vmatpush2.xpose.msra.mxu0 0.0
    %1425 = vmatprep.subr.mxu0 0.0
    %1426 = vmatpush2.xpose.msra.mxu0 0.0
    %1427 = vmatprep.subr.mxu0 0.0
    %1428 = vmatpush2.xpose.msra.mxu0 0.0
    %1429 = vmatprep.subr.mxu0 0.0
    %1430 = vmatpush2.xpose.msra.mxu0 0.0
    %1431 = vmatprep.subr.mxu0 0.0
    %1432 = vmatpush2.xpose.msra.mxu0 0.0
    %1433 = vmatprep.subr.mxu0 0.0
    %1434 = vmatpush2.xpose.msra.mxu0 0.0
    %1435 = vmatprep.subr.mxu0 0.0
    %1436 = vmatpush2.xpose.msra.mxu0 0.0
    %1437 = vmatprep.subr.mxu0 0.0
    %1438 = vmatpush2.xpose.msra.mxu0 0.0
    %1439 = vmatprep.subr.mxu0 0.0
    %1440 = vmatpush2.xpose.msra.mxu0 0.0
    %1441 = vmatprep.mubr.f32.mxu0 0.0
    %1442 = vmatmul.mubr.f32.gmra.mxu0 %v1369
    %v1443 = vpop.f32.mrf.mxu0
    %v1444 = vadd.f32 0.0, %v1443
    %v1445 = vpop.f32.mrf.mxu0
    %1446 = vmatprep.mubr.f32.mxu0 0.0
    %1447 = vmatmul.mubr.f32.gmra.mxu0 %v1371
    %v1448 = vpop.f32.mrf.mxu0
    %v1449 = vadd.f32 0.0, %v1448
    %v1450 = vpop.f32.mrf.mxu0
    %1451 = vdwg.mxu0
    %v1452 = vmul.f32 %v1444, 0.25
    %v1453 = vmul.f32 %v1449, 0.25
    %v1454 = vsel %vm135, %v1452, -inf
    %1455 = vmax.xlane.f32.xlu0 %v1454
    %v1456 = vpop.xlane.xlu0 %1455
    %v1457 = vsel %vm135, %v1453, -inf
    %1458 = vmax.xlane.f32.xlu0 %v1457
    %v1459 = vpop.xlane.xlu0 %1458
    %v1460 = vsub.f32 %v1452, %v1456
    %v1461 = vsub.f32 %v1453, %v1459
    %v1462 = vmul.f32 %v1460, 1.442695
    %v1463 = vpow.pop %v1462
    %v1464 = vmul.f32 %v1461, 1.442695
    %v1465 = vpow.pop %v1464
    %v1466 = vsel %vm135, %v1463, 0.0
    %1467 = vadd.xlane.f32.xlu0 %v1466
    %v1468 = vpop.xlane.xlu0 %1467
    %v1469 = vsel %vm135, %v1465, 0.0
    %1470 = vadd.xlane.f32.xlu0 %v1469
    %v1471 = vpop.xlane.xlu0 %1470
    %v1472 = vrcp.pop %v1468
    %v1473 = vmul.f32 %v1463, %v1472
    %v1474 = vrcp.pop %v1471
    %v1475 = vmul.f32 %v1465, %v1474
    %1476 = vrot.lane.b32.xlu0 %v121, 96
    %v1477 = vpop.permute.xlu0 %1476
    %1478 = vrot.lane.b32.xlu0 %v127, 96
    %v1479 = vpop.permute.xlu0 %1478
    %v1483 = vsel %vm135, %v1473, 0
    %v1486 = vsel %vm135, %v1475, 0
    %1488 = vmatprep.subr.mxu0 0.0
    %1489 = vmatpush1.msra.mxu0 0.0
    %1490 = vmatprep.subr.mxu0 0.0
    %1491 = vmatpush1.msra.mxu0 0.0
    %1492 = vmatprep.subr.mxu0 0.0
    %1493 = vmatpush1.msra.mxu0 0.0
    %1494 = vmatprep.subr.mxu0 0.0
    %1495 = vmatpush1.msra.mxu0 0.0
    %1496 = vmatprep.subr.mxu0 0.0
    %1497 = vmatpush1.msra.mxu0 0.0
    %1498 = vmatprep.subr.mxu0 0.0
    %1499 = vmatpush1.msra.mxu0 0.0
    %1500 = vmatprep.subr.mxu0 0.0
    %1501 = vmatpush1.msra.mxu0 0.0
    %1502 = vmatprep.subr.mxu0 0.0
    %1503 = vmatpush1.msra.mxu0 0.0
    %1504 = vmatprep.subr.mxu0 0.0
    %1505 = vmatpush1.msra.mxu0 0.0
    %1506 = vmatprep.subr.mxu0 0.0
    %1507 = vmatpush1.msra.mxu0 0.0
    %1508 = vmatprep.subr.mxu0 0.0
    %1509 = vmatpush1.msra.mxu0 0.0
    %1510 = vmatprep.subr.mxu0 0.0
    %1511 = vmatpush1.msra.mxu0 0.0
    %1512 = vmatprep.subr.mxu0 0.0
    %1513 = vmatpush1.msra.mxu0 0.0
    %1514 = vmatprep.subr.mxu0 0.0
    %1515 = vmatpush1.msra.mxu0 0.0
    %1516 = vmatprep.subr.mxu0 0.0
    %1517 = vmatpush1.msra.mxu0 %v1479
    %1518 = vmatprep.subr.mxu0 0.0
    %1519 = vmatpush1.msra.mxu0 %v1477
    %1520 = vmatprep.subr.mxu0 0.0
    %1521 = vmatpush2.msra.mxu0 0.0
    %1522 = vmatprep.subr.mxu0 0.0
    %1523 = vmatpush2.msra.mxu0 0.0
    %1524 = vmatprep.subr.mxu0 0.0
    %1525 = vmatpush2.msra.mxu0 0.0
    %1526 = vmatprep.subr.mxu0 0.0
    %1527 = vmatpush2.msra.mxu0 0.0
    %1528 = vmatprep.subr.mxu0 0.0
    %1529 = vmatpush2.msra.mxu0 0.0
    %1530 = vmatprep.subr.mxu0 0.0
    %1531 = vmatpush2.msra.mxu0 0.0
    %1532 = vmatprep.subr.mxu0 0.0
    %1533 = vmatpush2.msra.mxu0 0.0
    %1534 = vmatprep.subr.mxu0 0.0
    %1535 = vmatpush2.msra.mxu0 0.0
    %1536 = vmatprep.subr.mxu0 0.0
    %1537 = vmatpush2.msra.mxu0 0.0
    %1538 = vmatprep.subr.mxu0 0.0
    %1539 = vmatpush2.msra.mxu0 0.0
    %1540 = vmatprep.subr.mxu0 0.0
    %1541 = vmatpush2.msra.mxu0 0.0
    %1542 = vmatprep.subr.mxu0 0.0
    %1543 = vmatpush2.msra.mxu0 0.0
    %1544 = vmatprep.subr.mxu0 0.0
    %1545 = vmatpush2.msra.mxu0 0.0
    %1546 = vmatprep.subr.mxu0 0.0
    %1547 = vmatpush2.msra.mxu0 0.0
    %1548 = vmatprep.subr.mxu0 0.0
    %1549 = vmatpush2.msra.mxu0 0.0
    %1550 = vmatprep.subr.mxu0 0.0
    %1551 = vmatpush2.msra.mxu0 0.0
    %1552 = vmatprep.mubr.f32.mxu0 0.0
    %1553 = vmatmul.mubr.f32.gmra.mxu0 %v1483
    %v1554 = vpop.f32.mrf.mxu0
    %v1555 = vadd.f32 0.0, %v1554
    %v1556 = vpop.f32.mrf.mxu0
    %1557 = vmatprep.mubr.f32.mxu0 0.0
    %1558 = vmatmul.mubr.f32.gmra.mxu0 %v1486
    %v1559 = vpop.f32.mrf.mxu0
    %v1560 = vadd.f32 0.0, %v1559
    %v1561 = vpop.f32.mrf.mxu0
    %1562 = vdwg.mxu0
    %1563 = vrot.lane.b32.xlu0 %v119, 80
    %v1564 = vpop.permute.xlu0 %1563
    %1565 = vrot.lane.b32.xlu0 %v125, 80
    %v1566 = vpop.permute.xlu0 %1565
    %1567 = vrot.lane.b32.xlu0 %v119, 16
    %v1568 = vpop.permute.xlu0 %1567
    %1569 = vrot.lane.b32.xlu0 %v125, 16
    %v1570 = vpop.permute.xlu0 %1569
    %v1571 = vsel %vm135, %v1564, 0
    %v1573 = vsel %vm135, %v1566, 0
    %v1575 = vsel %vm135, %v1568, 0
    %v1577 = vsel %vm135, %v1570, 0
    %1579 = vmatprep.subr.mxu0 0.0
    %1580 = vmatpush1.xpose.msra.mxu0 0.0
    %1581 = vmatprep.subr.mxu0 0.0
    %1582 = vmatpush1.xpose.msra.mxu0 0.0
    %1583 = vmatprep.subr.mxu0 0.0
    %1584 = vmatpush1.xpose.msra.mxu0 0.0
    %1585 = vmatprep.subr.mxu0 0.0
    %1586 = vmatpush1.xpose.msra.mxu0 0.0
    %1587 = vmatprep.subr.mxu0 0.0
    %1588 = vmatpush1.xpose.msra.mxu0 0.0
    %1589 = vmatprep.subr.mxu0 0.0
    %1590 = vmatpush1.xpose.msra.mxu0 0.0
    %1591 = vmatprep.subr.mxu0 0.0
    %1592 = vmatpush1.xpose.msra.mxu0 0.0
    %1593 = vmatprep.subr.mxu0 0.0
    %1594 = vmatpush1.xpose.msra.mxu0 0.0
    %1595 = vmatprep.subr.mxu0 0.0
    %1596 = vmatpush1.xpose.msra.mxu0 0.0
    %1597 = vmatprep.subr.mxu0 0.0
    %1598 = vmatpush1.xpose.msra.mxu0 0.0
    %1599 = vmatprep.subr.mxu0 0.0
    %1600 = vmatpush1.xpose.msra.mxu0 0.0
    %1601 = vmatprep.subr.mxu0 0.0
    %1602 = vmatpush1.xpose.msra.mxu0 0.0
    %1603 = vmatprep.subr.mxu0 0.0
    %1604 = vmatpush1.xpose.msra.mxu0 0.0
    %1605 = vmatprep.subr.mxu0 0.0
    %1606 = vmatpush1.xpose.msra.mxu0 0.0
    %1607 = vmatprep.subr.mxu0 0.0
    %1608 = vmatpush1.xpose.msra.mxu0 %v1577
    %1609 = vmatprep.subr.mxu0 0.0
    %1610 = vmatpush1.xpose.msra.mxu0 %v1575
    %1611 = vmatprep.subr.mxu0 0.0
    %1612 = vmatpush2.xpose.msra.mxu0 0.0
    %1613 = vmatprep.subr.mxu0 0.0
    %1614 = vmatpush2.xpose.msra.mxu0 0.0
    %1615 = vmatprep.subr.mxu0 0.0
    %1616 = vmatpush2.xpose.msra.mxu0 0.0
    %1617 = vmatprep.subr.mxu0 0.0
    %1618 = vmatpush2.xpose.msra.mxu0 0.0
    %1619 = vmatprep.subr.mxu0 0.0
    %1620 = vmatpush2.xpose.msra.mxu0 0.0
    %1621 = vmatprep.subr.mxu0 0.0
    %1622 = vmatpush2.xpose.msra.mxu0 0.0
    %1623 = vmatprep.subr.mxu0 0.0
    %1624 = vmatpush2.xpose.msra.mxu0 0.0
    %1625 = vmatprep.subr.mxu0 0.0
    %1626 = vmatpush2.xpose.msra.mxu0 0.0
    %1627 = vmatprep.subr.mxu0 0.0
    %1628 = vmatpush2.xpose.msra.mxu0 0.0
    %1629 = vmatprep.subr.mxu0 0.0
    %1630 = vmatpush2.xpose.msra.mxu0 0.0
    %1631 = vmatprep.subr.mxu0 0.0
    %1632 = vmatpush2.xpose.msra.mxu0 0.0
    %1633 = vmatprep.subr.mxu0 0.0
    %1634 = vmatpush2.xpose.msra.mxu0 0.0
    %1635 = vmatprep.subr.mxu0 0.0
    %1636 = vmatpush2.xpose.msra.mxu0 0.0
    %1637 = vmatprep.subr.mxu0 0.0
    %1638 = vmatpush2.xpose.msra.mxu0 0.0
    %1639 = vmatprep.subr.mxu0 0.0
    %1640 = vmatpush2.xpose.msra.mxu0 0.0
    %1641 = vmatprep.subr.mxu0 0.0
    %1642 = vmatpush2.xpose.msra.mxu0 0.0
    %1643 = vmatprep.mubr.f32.mxu0 0.0
    %1644 = vmatmul.mubr.f32.gmra.mxu0 %v1571
    %v1645 = vpop.f32.mrf.mxu0
    %v1646 = vadd.f32 0.0, %v1645
    %v1647 = vpop.f32.mrf.mxu0
    %1648 = vmatprep.mubr.f32.mxu0 0.0
    %1649 = vmatmul.mubr.f32.gmra.mxu0 %v1573
    %v1650 = vpop.f32.mrf.mxu0
    %v1651 = vadd.f32 0.0, %v1650
    %v1652 = vpop.f32.mrf.mxu0
    %1653 = vdwg.mxu0
    %v1654 = vmul.f32 %v1646, 0.25
    %v1655 = vmul.f32 %v1651, 0.25
    %v1656 = vsel %vm135, %v1654, -inf
    %1657 = vmax.xlane.f32.xlu0 %v1656
    %v1658 = vpop.xlane.xlu0 %1657
    %v1659 = vsel %vm135, %v1655, -inf
    %1660 = vmax.xlane.f32.xlu0 %v1659
    %v1661 = vpop.xlane.xlu0 %1660
    %v1662 = vsub.f32 %v1654, %v1658
    %v1663 = vsub.f32 %v1655, %v1661
    %v1664 = vmul.f32 %v1662, 1.442695
    %v1665 = vpow.pop %v1664
    %v1666 = vmul.f32 %v1663, 1.442695
    %v1667 = vpow.pop %v1666
    %v1668 = vsel %vm135, %v1665, 0.0
    %1669 = vadd.xlane.f32.xlu0 %v1668
    %v1670 = vpop.xlane.xlu0 %1669
    %v1671 = vsel %vm135, %v1667, 0.0
    %1672 = vadd.xlane.f32.xlu0 %v1671
    %v1673 = vpop.xlane.xlu0 %1672
    %v1674 = vrcp.pop %v1670
    %v1675 = vmul.f32 %v1665, %v1674
    %v1676 = vrcp.pop %v1673
    %v1677 = vmul.f32 %v1667, %v1676
    %1678 = vrot.lane.b32.xlu0 %v121, 80
    %v1679 = vpop.permute.xlu0 %1678
    %1680 = vrot.lane.b32.xlu0 %v127, 80
    %v1681 = vpop.permute.xlu0 %1680
    %v1685 = vsel %vm135, %v1675, 0
    %v1688 = vsel %vm135, %v1677, 0
    %1690 = vmatprep.subr.mxu0 0.0
    %1691 = vmatpush1.msra.mxu0 0.0
    %1692 = vmatprep.subr.mxu0 0.0
    %1693 = vmatpush1.msra.mxu0 0.0
    %1694 = vmatprep.subr.mxu0 0.0
    %1695 = vmatpush1.msra.mxu0 0.0
    %1696 = vmatprep.subr.mxu0 0.0
    %1697 = vmatpush1.msra.mxu0 0.0
    %1698 = vmatprep.subr.mxu0 0.0
    %1699 = vmatpush1.msra.mxu0 0.0
    %1700 = vmatprep.subr.mxu0 0.0
    %1701 = vmatpush1.msra.mxu0 0.0
    %1702 = vmatprep.subr.mxu0 0.0
    %1703 = vmatpush1.msra.mxu0 0.0
    %1704 = vmatprep.subr.mxu0 0.0
    %1705 = vmatpush1.msra.mxu0 0.0
    %1706 = vmatprep.subr.mxu0 0.0
    %1707 = vmatpush1.msra.mxu0 0.0
    %1708 = vmatprep.subr.mxu0 0.0
    %1709 = vmatpush1.msra.mxu0 0.0
    %1710 = vmatprep.subr.mxu0 0.0
    %1711 = vmatpush1.msra.mxu0 0.0
    %1712 = vmatprep.subr.mxu0 0.0
    %1713 = vmatpush1.msra.mxu0 0.0
    %1714 = vmatprep.subr.mxu0 0.0
    %1715 = vmatpush1.msra.mxu0 0.0
    %1716 = vmatprep.subr.mxu0 0.0
    %1717 = vmatpush1.msra.mxu0 0.0
    %1718 = vmatprep.subr.mxu0 0.0
    %1719 = vmatpush1.msra.mxu0 %v1681
    %1720 = vmatprep.subr.mxu0 0.0
    %1721 = vmatpush1.msra.mxu0 %v1679
    %1722 = vmatprep.subr.mxu0 0.0
    %1723 = vmatpush2.msra.mxu0 0.0
    %1724 = vmatprep.subr.mxu0 0.0
    %1725 = vmatpush2.msra.mxu0 0.0
    %1726 = vmatprep.subr.mxu0 0.0
    %1727 = vmatpush2.msra.mxu0 0.0
    %1728 = vmatprep.subr.mxu0 0.0
    %1729 = vmatpush2.msra.mxu0 0.0
    %1730 = vmatprep.subr.mxu0 0.0
    %1731 = vmatpush2.msra.mxu0 0.0
    %1732 = vmatprep.subr.mxu0 0.0
    %1733 = vmatpush2.msra.mxu0 0.0
    %1734 = vmatprep.subr.mxu0 0.0
    %1735 = vmatpush2.msra.mxu0 0.0
    %1736 = vmatprep.subr.mxu0 0.0
    %1737 = vmatpush2.msra.mxu0 0.0
    %1738 = vmatprep.subr.mxu0 0.0
    %1739 = vmatpush2.msra.mxu0 0.0
    %1740 = vmatprep.subr.mxu0 0.0
    %1741 = vmatpush2.msra.mxu0 0.0
    %1742 = vmatprep.subr.mxu0 0.0
    %1743 = vmatpush2.msra.mxu0 0.0
    %1744 = vmatprep.subr.mxu0 0.0
    %1745 = vmatpush2.msra.mxu0 0.0
    %1746 = vmatprep.subr.mxu0 0.0
    %1747 = vmatpush2.msra.mxu0 0.0
    %1748 = vmatprep.subr.mxu0 0.0
    %1749 = vmatpush2.msra.mxu0 0.0
    %1750 = vmatprep.subr.mxu0 0.0
    %1751 = vmatpush2.msra.mxu0 0.0
    %1752 = vmatprep.subr.mxu0 0.0
    %1753 = vmatpush2.msra.mxu0 0.0
    %1754 = vmatprep.mubr.f32.mxu0 0.0
    %1755 = vmatmul.mubr.f32.gmra.mxu0 %v1685
    %v1756 = vpop.f32.mrf.mxu0
    %v1757 = vadd.f32 0.0, %v1756
    %v1758 = vpop.f32.mrf.mxu0
    %1759 = vmatprep.mubr.f32.mxu0 0.0
    %1760 = vmatmul.mubr.f32.gmra.mxu0 %v1688
    %v1761 = vpop.f32.mrf.mxu0
    %v1762 = vadd.f32 0.0, %v1761
    %v1763 = vpop.f32.mrf.mxu0
    %1764 = vdwg.mxu0
    %1767 = vrot.lane.b32.xlu0 %v1353, 16
    %v1768 = vpop.permute.xlu0 %1767
    %1769 = vrot.lane.b32.xlu0 %v1358, 16
    %v1770 = vpop.permute.xlu0 %1769
    %1775 = vrot.lane.b32.xlu0 %v1555, 32
    %v1776 = vpop.permute.xlu0 %1775
    %1777 = vrot.lane.b32.xlu0 %v1560, 32
    %v1778 = vpop.permute.xlu0 %1777
    %1783 = vrot.lane.b32.xlu0 %v1757, 48
    %v1784 = vpop.permute.xlu0 %1783
    %1785 = vrot.lane.b32.xlu0 %v1762, 48
    %v1786 = vpop.permute.xlu0 %1785
    %v1789 = vsel %vm135, %v1149, %v1768
    %v1790 = vsel %vm135, %v1154, %v1770
    %v1791 = vsel %vm27, %v1789, %v1776
    %v1792 = vsel %vm27, %v1790, %v1778
    %v1793 = vsel %vm960, %v1791, %v1784
    %v1794 = vsel %vm960, %v1792, %v1786
    %v1795 = vld [vmem:[%s2] sm:$0xff]
    %v1796 = vld [vmem:[%s2 + $0x8] sm:$0xff]
    %v1797 = vld [vmem:[%s2 + $0x10] sm:$0xff]
    %v1798 = vld [vmem:[%s2 + $0x18] sm:$0xff]
    %v1799 = vld [vmem:[%s2 + $0x20] sm:$0xff]
    %v1800 = vld [vmem:[%s2 + $0x28] sm:$0xff]
    %v1801 = vld [vmem:[%s2 + $0x30] sm:$0xff]
    %v1802 = vld [vmem:[%s2 + $0x38] sm:$0xff]
    %vm1803 = vcmask 523264
    %v1805 = vsel %vm1803, %v961, 0
    %v1808 = vsel %vm1803, %v962, 0
    %v1811 = vsel %vm1803, %v1793, 0
    %v1814 = vsel %vm1803, %v1794, 0
    %1816 = vmatprep.subr.mxu0 0.0
    %1817 = vmatpush1.msra.mxu0 0.0
    %1818 = vmatprep.subr.mxu0 0.0
    %1819 = vmatpush1.msra.mxu0 0.0
    %1820 = vmatprep.subr.mxu0 0.0
    %1821 = vmatpush1.msra.mxu0 0.0
    %1822 = vmatprep.subr.mxu0 0.0
    %1823 = vmatpush1.msra.mxu0 0.0
    %1824 = vmatprep.subr.mxu0 0.0
    %1825 = vmatpush1.msra.mxu0 0.0
    %1826 = vmatprep.subr.mxu0 0.0
    %1827 = vmatpush1.msra.mxu0 0.0
    %1828 = vmatprep.subr.mxu0 0.0
    %1829 = vmatpush1.msra.mxu0 0.0
    %1830 = vmatprep.subr.mxu0 0.0
    %1831 = vmatpush1.msra.mxu0 0.0
    %1832 = vmatprep.subr.mxu0 0.0
    %1833 = vmatpush1.msra.mxu0 %v1802
    %1834 = vmatprep.subr.mxu0 0.0
    %1835 = vmatpush1.msra.mxu0 %v1801
    %1836 = vmatprep.subr.mxu0 0.0
    %1837 = vmatpush1.msra.mxu0 %v1800
    %1838 = vmatprep.subr.mxu0 0.0
    %1839 = vmatpush1.msra.mxu0 %v1799
    %1840 = vmatprep.subr.mxu0 0.0
    %1841 = vmatpush1.msra.mxu0 %v1798
    %1842 = vmatprep.subr.mxu0 0.0
    %1843 = vmatpush1.msra.mxu0 %v1797
    %1844 = vmatprep.subr.mxu0 0.0
    %1845 = vmatpush1.msra.mxu0 %v1796
    %1846 = vmatprep.subr.mxu0 0.0
    %1847 = vmatpush1.msra.mxu0 %v1795
    %1848 = vmatprep.subr.mxu0 0.0
    %1849 = vmatpush2.msra.mxu0 0.0
    %1850 = vmatprep.subr.mxu0 0.0
    %1851 = vmatpush2.msra.mxu0 0.0
    %1852 = vmatprep.subr.mxu0 0.0
    %1853 = vmatpush2.msra.mxu0 0.0
    %1854 = vmatprep.subr.mxu0 0.0
    %1855 = vmatpush2.msra.mxu0 0.0
    %1856 = vmatprep.subr.mxu0 0.0
    %1857 = vmatpush2.msra.mxu0 0.0
    %1858 = vmatprep.subr.mxu0 0.0
    %1859 = vmatpush2.msra.mxu0 0.0
    %1860 = vmatprep.subr.mxu0 0.0
    %1861 = vmatpush2.msra.mxu0 0.0
    %1862 = vmatprep.subr.mxu0 0.0
    %1863 = vmatpush2.msra.mxu0 0.0
    %1864 = vmatprep.subr.mxu0 0.0
    %1865 = vmatpush2.msra.mxu0 0.0
    %1866 = vmatprep.subr.mxu0 0.0
    %1867 = vmatpush2.msra.mxu0 0.0
    %1868 = vmatprep.subr.mxu0 0.0
    %1869 = vmatpush2.msra.mxu0 0.0
    %1870 = vmatprep.subr.mxu0 0.0
    %1871 = vmatpush2.msra.mxu0 0.0
    %1872 = vmatprep.subr.mxu0 0.0
    %1873 = vmatpush2.msra.mxu0 0.0
    %1874 = vmatprep.subr.mxu0 0.0
    %1875 = vmatpush2.msra.mxu0 0.0
    %1876 = vmatprep.subr.mxu0 0.0
    %1877 = vmatpush2.msra.mxu0 0.0
    %1878 = vmatprep.subr.mxu0 0.0
    %1879 = vmatpush2.msra.mxu0 0.0
    %1880 = vmatprep.mubr.f32.mxu0 0.0
    %1881 = vmatmul.mubr.f32.gmra.mxu0 %v1805
    %v1882 = vpop.f32.mrf.mxu0
    %v1883 = vadd.f32 0.0, %v1882
    %v1884 = vpop.f32.mrf.mxu0
    %1885 = vmatprep.mubr.f32.mxu0 0.0
    %1886 = vmatmul.mubr.f32.gmra.mxu0 %v1808
    %v1887 = vpop.f32.mrf.mxu0
    %v1888 = vadd.f32 0.0, %v1887
    %v1889 = vpop.f32.mrf.mxu0
    %1890 = vmatprep.mubr.f32.mxu0 0.0
    %1891 = vmatmul.mubr.f32.gmra.mxu0 %v1811
    %v1892 = vpop.f32.mrf.mxu0
    %v1893 = vadd.f32 0.0, %v1892
    %v1894 = vpop.f32.mrf.mxu0
    %1895 = vmatprep.mubr.f32.mxu0 0.0
    %1896 = vmatmul.mubr.f32.gmra.mxu0 %v1814
    %v1897 = vpop.f32.mrf.mxu0
    %v1898 = vadd.f32 0.0, %v1897
    %v1899 = vpop.f32.mrf.mxu0
    %1900 = vdwg.mxu0
    %1901 = vst.msk [vmem:[#allocation2] sm:$0xff] %vm27, %v1883
    %1902 = vst.msk [vmem:[#allocation2 + $0x8] sm:$0xff] %vm27, %v1888
    %1903 = vst.msk [vmem:[#allocation2 + $0x10] sm:$0xff] %vm27, %v1893
    %1904 = vst.msk [vmem:[#allocation2 + $0x18] sm:$0xff] %vm27, %v1898
    // Predicated region
    $region14: #{tpu_custom_call.1} parent=1 // pred_check
      _
    $region15: #{tpu_custom_call.1} parent=1 // pred_check_branch
      %1906 = sbr.rel (0) target = $region17
    $region16: #{tpu_custom_call.1} parent=1 // pred_region
      %s1908 = ssub.s32 512, 512
      %1909 = vsyncadd [#allocation3], %s1908
      %s1910 = sshll.u32 [#allocation2], 4
      %s1911 = int_to_ptr.vmem [resolvable:$true] %s1910
      %1916 = dma.vmem_to_hbm [thread:$0]  %s1911, 512, %s3, [#allocation3], 128, 128, 8
    $region17: #{tpu_custom_call.1} parent=1 // pred_fallthru
      _
    // Predicated region
    $region18: #{tpu_custom_call.1} parent=1 // pred_check
      _
    $region19: #{tpu_custom_call.1} parent=1 // pred_check_branch
      %1918 = sbr.rel (0) target = $region21
    $region20: #{tpu_custom_call.1} parent=1 // pred_region
      %1919 = dma.done [#allocation3], 512
    $region21: #{tpu_custom_call.1} parent=1 // pred_fallthru
      _
    %1920 = vsyncpa [#allocation3], 1

</llo_original>
